<compile_context>
chip_gen: v7x
topology: tpu7x:2x2x1
jax: 0.10.0
libtpu: 0.0.40
codegen_flags: <defaults>
</compile_context>

<pallas_src>
import functools
import math

import jax
import jax.numpy as jnp
from jax.experimental import pallas as pl
from jax.experimental.pallas import tpu as pltpu


# ----------------------------------------------------------------------------
# Helpers
# ----------------------------------------------------------------------------
def _round_up(x, m):
    return ((x + m - 1) // m) * m


def _pick_tile(n, pref, unit):
    """Largest multiple of `unit` <= pref that divides round_up(n, unit)."""
    n_pad = _round_up(n, unit)
    t = min(pref, n_pad)
    t -= t % unit
    t = max(t, unit)
    while n_pad % t:
        t -= unit
    return t, n_pad


def _heads_per_block(num_heads, dk):
    """How many heads per attention grid step (targets a 128-lane-wide block)."""
    hb = max(1, 128 // dk) if dk < 128 else 1
    while num_heads % hb:
        hb -= 1
    return hb


@functools.lru_cache(maxsize=None)
def _vmem_limit_bytes():
    """Generation-aware VMEM limit (~70% of physical, clamped)."""
    try:
        cap = int(pltpu.get_tpu_info().vmem_capacity_bytes)
    except Exception:
        cap = 64 * 1024 * 1024      # assume the smallest (v7x per-TC)
    return int(min(max(cap * 0.7, 32 * 1024 * 1024), 100 * 1024 * 1024))


# ----------------------------------------------------------------------------
# Linear projection kernel:  y = x @ W.T + b   (PyTorch weight layout kept)
# ----------------------------------------------------------------------------
def _linear_kernel(x_ref, w_ref, b_ref, o_ref):
    # x_ref: (tm, d_in)  w_ref: (tn, d_in)  b_ref: (1, tn)  o_ref: (tm, tn)
    y = jax.lax.dot_general(
        x_ref[...], w_ref[...], (((1,), (1,)), ((), ())),
        preferred_element_type=jnp.float32)
    o_ref[...] = (y + b_ref[...].astype(jnp.float32)).astype(o_ref.dtype)


def _linear(x2d, w, b, *, tile_m=256, tile_n=None, out_dtype=None):
    """x2d: (M, d_in), w: (d_out, d_in) [PyTorch layout], b: (d_out,)."""
    M, d_in = x2d.shape
    d_out = w.shape[0]
    out_dtype = out_dtype or x2d.dtype
    b2d = b.reshape(1, d_out)

    # Row tile: largest multiple of 8 <= tile_m that divides M (pads <= 7 rows,
    # never the old "pad M up to a multiple of tm" behaviour).
    tm, m_pad = _pick_tile(M, tile_m, 8)
    if m_pad != M:
        x2d = jnp.pad(x2d, ((0, m_pad - M), (0, 0)))

    # Column tile: cap the (tn, d_in) weight block to ~8 MiB so double
    # buffering fits v7x's 64 MiB VMEM at large d_model, and so the column
    # axis provides a second parallel grid axis for the two v7x TensorCores.
    if tile_n is None:
        tile_n = max(128, (8 * 1024 * 1024) // max(1, d_in * w.dtype.itemsize))
    if d_out % 128 == 0:
        tn, _ = _pick_tile(d_out, tile_n, 128)
    else:
        tn = d_out                       # full-dim block is always legal

    grid = (d_out // tn, m_pad // tm)    # (col tiles, row tiles)

    out = pl.pallas_call(
        _linear_kernel,
        out_shape=jax.ShapeDtypeStruct((m_pad, d_out), out_dtype),
        grid_spec=pltpu.PrefetchScalarGridSpec(
            num_scalar_prefetch=0,
            grid=grid,
            in_specs=[
                pl.BlockSpec((tm, d_in), lambda n, m: (m, 0)),   # activations
                pl.BlockSpec((tn, d_in), lambda n, m: (n, 0)),   # weight (resident per n)
                pl.BlockSpec((1, tn), lambda n, m: (0, n)),      # bias
            ],
            out_specs=pl.BlockSpec((tm, tn), lambda n, m: (m, n)),
        ),
        compiler_params=pltpu.CompilerParams(
            dimension_semantics=("parallel", "parallel"),
            vmem_limit_bytes=_vmem_limit_bytes(),
        ),
        cost_estimate=pl.CostEstimate(
            flops=2 * m_pad * d_in * d_out,
            transcendentals=0,
            bytes_accessed=(m_pad * d_in + d_out * d_in + d_out + m_pad * d_out)
            * x2d.dtype.itemsize,
        ),
    )(x2d, w, b2d)

    return out[:M] if m_pad != M else out


# ----------------------------------------------------------------------------
# Flash attention on (B, S, C) activations, heads addressed by column blocks.
# ----------------------------------------------------------------------------
def _flash_attention(q, k, v, *, num_heads, d_model, scale,
                     q_blk_off=0, k_blk_off=0, v_blk_off=0,
                     tq_pref=256, tkv_pref=256, out_dtype=None):
    """q: (B, Sq, Cq), k/v: (B, Skv, Ck/Cv).

    Head h of Q/K/V occupies columns [off*hw + h*dk : ...] of its array, where
    hw = heads_per_block * dk and *_blk_off are in units of hw-wide blocks
    (this lets Q/K/V all live inside one fused projection output with no
    slicing copies).  Returns (B, Sq, d_model) already in combine_heads layout.
    """
    B, Sq, _ = q.shape
    _, Skv, _ = k.shape
    dk = d_model // num_heads
    hb = _heads_per_block(num_heads, dk)
    hw = hb * dk
    n_hblk = num_heads // hb
    out_dtype = out_dtype or q.dtype

    tq, sq_pad = _pick_tile(Sq, tq_pref, 8)
    tkv, skv_pad = _pick_tile(Skv, tkv_pref, 8)
    if sq_pad != Sq:
        q = jnp.pad(q, ((0, 0), (0, sq_pad - Sq), (0, 0)))
    if skv_pad != Skv:
        k = jnp.pad(k, ((0, 0), (0, skv_pad - Skv), (0, 0)))
        v = jnp.pad(v, ((0, 0), (0, skv_pad - Skv), (0, 0)))
    mask_kv = skv_pad != Skv          # static: zero-cost in the common case

    grid = (B, n_hblk, sq_pad // tq, skv_pad // tkv)

    def kernel(q_ref, k_ref, v_ref, o_ref, m_sc, l_sc, acc_sc):
        ki = pl.program_id(3)

        @pl.when(ki == 0)
        def _():
            m_sc[...] = jnp.full_like(m_sc, -jnp.inf)
            l_sc[...] = jnp.zeros_like(l_sc)
            acc_sc[...] = jnp.zeros_like(acc_sc)

        q_blk = q_ref[0]              # (tq, hw)  -- native dtype into the MXU
        k_blk = k_ref[0]              # (tkv, hw)
        v_blk = v_ref[0]              # (tkv, hw)

        if mask_kv:
            col = ki * tkv + jax.lax.broadcasted_iota(jnp.int32, (tq, tkv), 1)
            valid = col < Skv

        for h in range(hb):           # static unrolled loop over heads in block
            sl = slice(h * dk, (h + 1) * dk)
            s = jax.lax.dot_general(
                q_blk[:, sl], k_blk[:, sl], (((1,), (1,)), ((), ())),
                preferred_element_type=jnp.float32) * scale
            if mask_kv:
                s = jnp.where(valid, s, jnp.float32(-1e30))

            m_prev = m_sc[h]                                    # (tq, 1)
            m_new = jnp.maximum(m_prev, jnp.max(s, axis=-1, keepdims=True))
            alpha = jnp.exp(m_prev - m_new)
            p = jnp.exp(s - m_new)                              # (tq, tkv) f32
            l_sc[h] = alpha * l_sc[h] + jnp.sum(p, axis=-1, keepdims=True)
            acc_sc[h] = alpha * acc_sc[h] + jnp.dot(
                p.astype(v_blk.dtype), v_blk[:, sl],
                preferred_element_type=jnp.float32)
            m_sc[h] = m_new

        @pl.when(ki == pl.num_programs(3) - 1)
        def _():
            parts = []
            for h in range(hb):
                inv = pl.reciprocal(l_sc[h], approx=True)       # EUP slot
                parts.append(acc_sc[h] * inv)
            full = parts[0] if hb == 1 else jnp.concatenate(parts, axis=-1)
            o_ref[0] = full.astype(o_ref.dtype)                 # lane-dense store

    itemsize = q.dtype.itemsize
    out = pl.pallas_call(
        kernel,
        out_shape=jax.ShapeDtypeStruct((B, sq_pad, d_model), out_dtype),
        grid_spec=pltpu.PrefetchScalarGridSpec(
            num_scalar_prefetch=0,
            grid=grid,
            in_specs=[
                pl.BlockSpec((1, tq, hw),
                             lambda b, hp, qi, ki: (b, qi, q_blk_off + hp)),
                pl.BlockSpec((1, tkv, hw),
                             lambda b, hp, qi, ki: (b, ki, k_blk_off + hp)),
                pl.BlockSpec((1, tkv, hw),
                             lambda b, hp, qi, ki: (b, ki, v_blk_off + hp)),
            ],
            out_specs=pl.BlockSpec((1, tq, hw),
                                   lambda b, hp, qi, ki: (b, qi, hp)),
            scratch_shapes=[
                pltpu.VMEM((hb, tq, 1), jnp.float32),    # running max m
                pltpu.VMEM((hb, tq, 1), jnp.float32),    # running denom l
                pltpu.VMEM((hb, tq, dk), jnp.float32),   # running output acc
            ],
        ),
        compiler_params=pltpu.CompilerParams(
            dimension_semantics=("parallel", "parallel", "parallel", "arbitrary"),
            vmem_limit_bytes=_vmem_limit_bytes(),
        ),
        cost_estimate=pl.CostEstimate(
            flops=4 * B * num_heads * sq_pad * skv_pad * dk,
            transcendentals=B * num_heads * sq_pad * skv_pad,
            bytes_accessed=(2 * B * sq_pad * d_model
                            + 2 * B * skv_pad * d_model) * itemsize,
        ),
    )(q, k, v)

    return out[:, :Sq, :] if sq_pad != Sq else out


# ----------------------------------------------------------------------------
# Full MultiHeadAttention forward
# ----------------------------------------------------------------------------
def multi_head_attention(q, k, v, wq, bq, wk, bk, wv, bv, wo, bo, *,
                         num_heads, mask=None, matmul_dtype=None):
    """Matches MultiHeadAttention.forward (mask=None path).

    matmul_dtype: optionally cast matmul operands (e.g. jnp.bfloat16) while
    keeping f32 MXU accumulation and f32 softmax state (recommended on v6e/v7x).
    """
    # TODO(synk): attention mask (masked_fill(mask==0, -1e9)) not implemented.
    assert mask is None, "mask is not supported by this Pallas implementation"

    B, Sq, D = q.shape
    _, Skv, _ = k.shape
    assert D % num_heads == 0
    dk = D // num_heads
    scale = 1.0 / math.sqrt(dk)
    orig_dtype = q.dtype

    def cast(a):
        return a if matmul_dtype is None else a.astype(matmul_dtype)

    hw = _heads_per_block(num_heads, dk) * dk     # column-block width (lanes)

    if (q is k) and (k is v):
        # Self-attention: fused QKV projection, read once from HBM.
        w_qkv = jnp.concatenate([wq, wk, wv], axis=0)         # (3D, D)
        b_qkv = jnp.concatenate([bq, bk, bv], axis=0)
        qkv = _linear(cast(q.reshape(B * Sq, D)), cast(w_qkv), b_qkv,
                      out_dtype=matmul_dtype).reshape(B, Sq, 3 * D)
        attn = _flash_attention(
            qkv, qkv, qkv, num_heads=num_heads, d_model=D, scale=scale,
            q_blk_off=0, k_blk_off=D // hw, v_blk_off=2 * D // hw)
    else:
        Qp = _linear(cast(q.reshape(B * Sq, D)), cast(wq), bq,
                     out_dtype=matmul_dtype).reshape(B, Sq, D)
        if k is v:
            # Cross-attention with a shared K/V source: fuse the K/V projection.
            w_kv = jnp.concatenate([wk, wv], axis=0)          # (2D, D)
            b_kv = jnp.concatenate([bk, bv], axis=0)
            kv = _linear(cast(k.reshape(B * Skv, D)), cast(w_kv), b_kv,
                         out_dtype=matmul_dtype).reshape(B, Skv, 2 * D)
            attn = _flash_attention(
                Qp, kv, kv, num_heads=num_heads, d_model=D, scale=scale,
                k_blk_off=0, v_blk_off=D // hw)
        else:
            Kp = _linear(cast(k.reshape(B * Skv, D)), cast(wk), bk,
                         out_dtype=matmul_dtype).reshape(B, Skv, D)
            Vp = _linear(cast(v.reshape(B * Skv, D)), cast(wv), bv,
                         out_dtype=matmul_dtype).reshape(B, Skv, D)
            attn = _flash_attention(Qp, Kp, Vp, num_heads=num_heads,
                                    d_model=D, scale=scale)

    # attn is already in combine_heads layout (B, Sq, D): no transpose needed.
    out = _linear(cast(attn.reshape(B * Sq, D)), cast(wo), bo,
                  out_dtype=orig_dtype)
    return out.reshape(B, Sq, D)


# ----------------------------------------------------------------------------
# Demo / correctness check
# ----------------------------------------------------------------------------
if __name__ == "__main__":
    batch, seq = 2, 8
    d_model, num_heads = 512, 8
    dk = d_model // num_heads

    key = jax.random.PRNGKey(0)
    keys = jax.random.split(key, 11)

    x_self = jax.random.normal(keys[0], (batch, seq, d_model), jnp.float32)
    q_in = jax.random.normal(keys[1], (batch, seq, d_model), jnp.float32)
    kv_in = jax.random.normal(keys[2], (batch, seq, d_model), jnp.float32)

    # PyTorch nn.Linear-style init: U(-1/sqrt(fan_in), 1/sqrt(fan_in))
    bound = 1.0 / math.sqrt(d_model)

    def init_linear(kw, kb):
        w = jax.random.uniform(kw, (d_model, d_model), jnp.float32, -bound, bound)
        b = jax.random.uniform(kb, (d_model,), jnp.float32, -bound, bound)
        return w, b

    wq, bq = init_linear(keys[3], keys[4])
    wk, bk = init_linear(keys[5], keys[6])
    wv, bv = init_linear(keys[7], keys[8])
    wo, bo = init_linear(keys[9], keys[10])

    # Pure-JAX reference (mirrors the PyTorch module, mask=None path).
    def ref_mha(q, k, v):
        hp = jax.lax.Precision.HIGHEST

        def lin(x, w, b):
            return jnp.dot(x, w.T, precision=hp) + b

        def split(x):
            b_, s_, _ = x.shape
            return x.reshape(b_, s_, num_heads, dk).transpose(0, 2, 1, 3)

        Qr, Kr, Vr = split(lin(q, wq, bq)), split(lin(k, wk, bk)), split(lin(v, wv, bv))
        sc = jnp.einsum("bhqd,bhkd->bhqk", Qr, Kr, precision=hp) / math.sqrt(dk)
        pr = jax.nn.softmax(sc, axis=-1)
        at = jnp.einsum("bhqk,bhkd->bhqd", pr, Vr, precision=hp)
        at = at.transpose(0, 2, 1, 3).reshape(q.shape[0], q.shape[1], d_model)
        return lin(at, wo, bo)

    # 1) Self-attention (exercises the fused QKV projection + offset reads).
    out_self = multi_head_attention(x_self, x_self, x_self,
                                    wq, bq, wk, bk, wv, bv, wo, bo,
                                    num_heads=num_heads)
    # 2) Cross-attention with shared K/V source (exercises the fused KV path).
    out_cross = multi_head_attention(q_in, kv_in, kv_in,
                                     wq, bq, wk, bk, wv, bv, wo, bo,
                                     num_heads=num_heads)
    jax.block_until_ready((out_self, out_cross))

    ref_self = ref_mha(x_self, x_self, x_self)
    ref_cross = ref_mha(q_in, kv_in, kv_in)

    assert out_self.shape == (batch, seq, d_model)
    assert jnp.allclose(out_self, ref_self, atol=2e-2, rtol=2e-2), \
        "self-attention mismatch vs reference"
    assert jnp.allclose(out_cross, ref_cross, atol=2e-2, rtol=2e-2), \
        "cross-attention mismatch vs reference"

    print("KERNEL_OK")
</pallas_src>

<mosaic_0001>
module attributes {stable_mosaic.version = 11 : i64} {
  func.func @_linear_kernel(%arg0: i32, %arg1: i32, %arg2: memref<16x512xf32, #tpu.memory_space<vmem>>, %arg3: memref<1536x512xf32, #tpu.memory_space<vmem>>, %arg4: memref<1x1536xf32, #tpu.memory_space<vmem>>, %arg5: memref<16x1536xf32, #tpu.memory_space<vmem>>) attributes {dimension_semantics = [#tpu.dimension_semantics<parallel>, #tpu.dimension_semantics<parallel>], iteration_bounds = array<i64: 1, 1>, scalar_prefetch = 0 : i64, scratch_operands = 0 : i64, tpu.core_type = #tpu.core_type<tc>, window_params = [{transform_indices = @transform_0, window_bounds = array<i64: 16, 512>}, {transform_indices = @transform_1, window_bounds = array<i64: 1536, 512>}, {transform_indices = @transform_2, window_bounds = array<i64: 1, 1536>}, {transform_indices = @transform_3, window_bounds = array<i64: 16, 1536>}]} {
    %c0 = arith.constant 0 : index
    %c0_0 = arith.constant 0 : index
    %0 = vector.load %arg2[%c0, %c0_0] : memref<16x512xf32, #tpu.memory_space<vmem>>, vector<16x512xf32>
    %c0_1 = arith.constant 0 : index
    %c0_2 = arith.constant 0 : index
    %1 = vector.load %arg3[%c0_1, %c0_2] : memref<1536x512xf32, #tpu.memory_space<vmem>>, vector<1536x512xf32>
    %cst = arith.constant dense<0.000000e+00> : vector<16x1536xf32>
    %2 = tpu.matmul %0, %1, %cst {dimension_numbers = #tpu.dot_dimension_numbers<[1], [1], [0], [0], [0, 0, 1, 0], [], []>} : vector<16x512xf32>, vector<1536x512xf32>, vector<16x1536xf32> -> vector<16x1536xf32>
    %c0_3 = arith.constant 0 : index
    %c0_4 = arith.constant 0 : index
    %3 = vector.load %arg4[%c0_3, %c0_4] : memref<1x1536xf32, #tpu.memory_space<vmem>>, vector<1x1536xf32>
    %4 = vector.broadcast %3 : vector<1x1536xf32> to vector<16x1536xf32>
    %5 = arith.addf %2, %4 : vector<16x1536xf32>
    %c0_5 = arith.constant 0 : index
    %c0_6 = arith.constant 0 : index
    %6 = vector.load %arg5[%c0_5, %c0_6] : memref<16x1536xf32, #tpu.memory_space<vmem>>, vector<16x1536xf32>
    tpu.vector_store %arg5[%c0_5, %c0_6], %5 {strides = array<i32>} : memref<16x1536xf32, #tpu.memory_space<vmem>>, vector<16x1536xf32>,
    return
  }
  func.func @transform_0(%arg0: i32, %arg1: i32) -> (i32, i32) {
    %c0_i32 = arith.constant 0 : i32
    %c0_i32_0 = arith.constant 0 : i32
    return %arg1, %c0_i32 : i32, i32
  }
  func.func @transform_1(%arg0: i32, %arg1: i32) -> (i32, i32) {
    %c0_i32 = arith.constant 0 : i32
    %c0_i32_0 = arith.constant 0 : i32
    return %arg0, %c0_i32 : i32, i32
  }
  func.func @transform_2(%arg0: i32, %arg1: i32) -> (i32, i32) {
    %c0_i32 = arith.constant 0 : i32
    %c0_i32_0 = arith.constant 0 : i32
    return %c0_i32, %arg0 : i32, i32
  }
  func.func @transform_3(%arg0: i32, %arg1: i32) -> (i32, i32) {
    %c0_i32 = arith.constant 0 : i32
    return %arg1, %arg0 : i32, i32
  }
}

</mosaic_0001>

<llo_original>
// kernel: tpu_custom_call.1
$region0: #{tpu_custom_call.1}
  #allocation0 [shape = 'u32[]', space=smem, size = 0x4, offset = 0x4, fixed_abs, tag = 'smem constant byte address 0x4 - core index']
  #allocation1 [shape = 'u32[144,128]{1,0:T(1,128)}', space=vmem, size = 0x12000, scoped, tag = 'internal scratch']
  %s0 = inlined_call_operand.hbm [shape: f32[16,512], index: 0, kind: input, shape index: {}]
  %s1 = inlined_call_operand.hbm [shape: f32[1536,512], index: 1, kind: input, shape index: {}]
  %s2 = inlined_call_operand.hbm [shape: f32[1,1536], index: 2, kind: input, shape index: {}]
  %s3 = inlined_call_operand.hbm [shape: f32[16,1536], index: 3, kind: output, shape index: {}]
  %s4 = sld [smem:[#allocation0]]
  $region34: #{tpu_custom_call.1} parent=0
    _
  %s6 = ssub.s32 1, %s4
  %s7 = scalar_select 0, %s6, %s4
  $region1: #{tpu_custom_call.1} parent=0
    #allocation2 [shape = 'u8[32768]{0}', space=vmem, size = 0x8000, scoped, tag = 'input window, operand 0, single buffered']
    #allocation3 [shape = 's32[1]{0}', space=sflag, size = 0x4, scoped, tag = 'scoped memory for tpu_custom_call.1']
    #allocation4 [shape = 's32[1]{0}', space=sflag, size = 0x4, scoped, tag = 'scoped memory for tpu_custom_call.1']
    #allocation5 [shape = 'u8[3145728]{0}', space=vmem, size = 0x300000, scoped, tag = 'input window, operand 1, single buffered']
    #allocation6 [shape = 's32[1]{0}', space=sflag, size = 0x4, scoped, tag = 'scoped memory for tpu_custom_call.1']
    #allocation7 [shape = 'u8[6144]{0}', space=vmem, size = 0x1800, scoped, tag = 'input window, operand 2, single buffered']
    #allocation8 [shape = 'u8[98304]{0}', space=vmem, size = 0x18000, scoped, tag = 'output window, operand 0, single buffered']
    %8 = vsyncpa [#allocation3], 0
    %9 = vsyncpa [#allocation6], 0
    %10 = vsyncpa [#allocation4], 0
    // Predicated region
    $region2: #{tpu_custom_call.1} parent=1 // pred_check
      _
    $region3: #{tpu_custom_call.1} parent=1 // pred_check_branch
      %12 = sbr.rel (0) target = $region5
    $region4: #{tpu_custom_call.1} parent=1 // pred_region
      %s14 = ssub.s32 1024, 1024
      %15 = vsyncadd [#allocation3], %s14
      %s16 = sshll.u32 [#allocation2], 4
      %s17 = int_to_ptr.vmem [resolvable:$true] %s16
      %22 = dma.hbm_to_vmem [thread:$0]  %s0, 1024, %s17, [#allocation3], 512, 512, 32
    $region5: #{tpu_custom_call.1} parent=1 // pred_fallthru
      _
    // Predicated region
    $region6: #{tpu_custom_call.1} parent=1 // pred_check
      _
    $region7: #{tpu_custom_call.1} parent=1 // pred_check_branch
      %24 = sbr.rel (0) target = $region9
    $region8: #{tpu_custom_call.1} parent=1 // pred_region
      %s26 = ssub.s32 98304, 98304
      %27 = vsyncadd [#allocation6], %s26
      %s28 = sshll.u32 [#allocation5], 4
      %s29 = int_to_ptr.vmem [resolvable:$true] %s28
      %34 = dma.hbm_to_vmem [thread:$0]  %s1, 98304, %s29, [#allocation6], 512, 512, 32
    $region9: #{tpu_custom_call.1} parent=1 // pred_fallthru
      _
    // Predicated region
    $region10: #{tpu_custom_call.1} parent=1 // pred_check
      _
    $region11: #{tpu_custom_call.1} parent=1 // pred_check_branch
      %36 = sbr.rel (0) target = $region13
    $region12: #{tpu_custom_call.1} parent=1 // pred_region
      %s38 = ssub.s32 192, 192
      %39 = vsyncadd [#allocation6], %s38
      %s41 = sshll.u32 [#allocation7], 4
      %s42 = int_to_ptr.vmem [resolvable:$true] %s41
      %44 = dma.hbm_to_vmem [thread:$0]  %s2, 192, %s42, [#allocation6]
    $region13: #{tpu_custom_call.1} parent=1 // pred_fallthru
      _
    // Predicated region
    $region14: #{tpu_custom_call.1} parent=1 // pred_check
      _
    $region15: #{tpu_custom_call.1} parent=1 // pred_check_branch
      %46 = sbr.rel (0) target = $region17
    $region16: #{tpu_custom_call.1} parent=1 // pred_region
      %47 = dma.done [#allocation3], 1024
    $region17: #{tpu_custom_call.1} parent=1 // pred_fallthru
      _
    // Predicated region
    $region18: #{tpu_custom_call.1} parent=1 // pred_check
      _
    $region19: #{tpu_custom_call.1} parent=1 // pred_check_branch
      %49 = sbr.rel (0) target = $region21
    $region20: #{tpu_custom_call.1} parent=1 // pred_region
      %50 = dma.done [#allocation6], 98304
    $region21: #{tpu_custom_call.1} parent=1 // pred_fallthru
      _
    // Predicated region
    $region22: #{tpu_custom_call.1} parent=1 // pred_check
      _
    $region23: #{tpu_custom_call.1} parent=1 // pred_check_branch
      %52 = sbr.rel (0) target = $region25
    $region24: #{tpu_custom_call.1} parent=1 // pred_region
      %53 = dma.done [#allocation6], 192
    $region25: #{tpu_custom_call.1} parent=1 // pred_fallthru
      _
    %v54 = vld [vmem:[#allocation2] sm:$0xff]
    %v55 = vld [vmem:[#allocation2 + $0x8] sm:$0xff]
    %v56 = vld [vmem:[#allocation2 + $0x10] sm:$0xff]
    %v57 = vld [vmem:[#allocation2 + $0x18] sm:$0xff]
    %v58 = vld [vmem:[#allocation2 + $0x20] sm:$0xff]
    %v59 = vld [vmem:[#allocation2 + $0x28] sm:$0xff]
    %v60 = vld [vmem:[#allocation2 + $0x30] sm:$0xff]
    %v61 = vld [vmem:[#allocation2 + $0x38] sm:$0xff]
    %v62 = vld [vmem:[#allocation5] sm:$0xff]
    %v63 = vld [vmem:[#allocation5 + $0x8] sm:$0xff]
    %v64 = vld [vmem:[#allocation5 + $0x10] sm:$0xff]
    %v65 = vld [vmem:[#allocation5 + $0x18] sm:$0xff]
    %v66 = vld [vmem:[#allocation5 + $0x20] sm:$0xff]
    %v67 = vld [vmem:[#allocation5 + $0x28] sm:$0xff]
    %v68 = vld [vmem:[#allocation5 + $0x30] sm:$0xff]
    %v69 = vld [vmem:[#allocation5 + $0x38] sm:$0xff]
    %v70 = vld [vmem:[#allocation5 + $0x40] sm:$0xff]
    %v71 = vld [vmem:[#allocation5 + $0x48] sm:$0xff]
    %v72 = vld [vmem:[#allocation5 + $0x50] sm:$0xff]
    %v73 = vld [vmem:[#allocation5 + $0x58] sm:$0xff]
    %v74 = vld [vmem:[#allocation5 + $0x60] sm:$0xff]
    %v75 = vld [vmem:[#allocation5 + $0x68] sm:$0xff]
    %v76 = vld [vmem:[#allocation5 + $0x70] sm:$0xff]
    %v77 = vld [vmem:[#allocation5 + $0x78] sm:$0xff]
    %v78 = vld [vmem:[#allocation5 + $0x80] sm:$0xff]
    %v79 = vld [vmem:[#allocation5 + $0x88] sm:$0xff]
    %v80 = vld [vmem:[#allocation5 + $0x90] sm:$0xff]
    %v81 = vld [vmem:[#allocation5 + $0x98] sm:$0xff]
    %v82 = vld [vmem:[#allocation5 + $0xa0] sm:$0xff]
    %v83 = vld [vmem:[#allocation5 + $0xa8] sm:$0xff]
    %v84 = vld [vmem:[#allocation5 + $0xb0] sm:$0xff]
    %v85 = vld [vmem:[#allocation5 + $0xb8] sm:$0xff]
    %v86 = vld [vmem:[#allocation5 + $0xc0] sm:$0xff]
    %v87 = vld [vmem:[#allocation5 + $0xc8] sm:$0xff]
    %v88 = vld [vmem:[#allocation5 + $0xd0] sm:$0xff]
    %v89 = vld [vmem:[#allocation5 + $0xd8] sm:$0xff]
    %v90 = vld [vmem:[#allocation5 + $0xe0] sm:$0xff]
    %v91 = vld [vmem:[#allocation5 + $0xe8] sm:$0xff]
    %v92 = vld [vmem:[#allocation5 + $0xf0] sm:$0xff]
    %v93 = vld [vmem:[#allocation5 + $0xf8] sm:$0xff]
    %v94 = vld [vmem:[#allocation5 + $0x100] sm:$0xff]
    %v95 = vld [vmem:[#allocation5 + $0x108] sm:$0xff]
    %v96 = vld [vmem:[#allocation5 + $0x110] sm:$0xff]
    %v97 = vld [vmem:[#allocation5 + $0x118] sm:$0xff]
    %v98 = vld [vmem:[#allocation5 + $0x120] sm:$0xff]
    %v99 = vld [vmem:[#allocation5 + $0x128] sm:$0xff]
    %v100 = vld [vmem:[#allocation5 + $0x130] sm:$0xff]
    %v101 = vld [vmem:[#allocation5 + $0x138] sm:$0xff]
    %v102 = vld [vmem:[#allocation5 + $0x140] sm:$0xff]
    %v103 = vld [vmem:[#allocation5 + $0x148] sm:$0xff]
    %v104 = vld [vmem:[#allocation5 + $0x150] sm:$0xff]
    %v105 = vld [vmem:[#allocation5 + $0x158] sm:$0xff]
    %v106 = vld [vmem:[#allocation5 + $0x160] sm:$0xff]
    %v107 = vld [vmem:[#allocation5 + $0x168] sm:$0xff]
    %v108 = vld [vmem:[#allocation5 + $0x170] sm:$0xff]
    %v109 = vld [vmem:[#allocation5 + $0x178] sm:$0xff]
    %v110 = vld [vmem:[#allocation5 + $0x180] sm:$0xff]
    %v111 = vld [vmem:[#allocation5 + $0x188] sm:$0xff]
    %v112 = vld [vmem:[#allocation5 + $0x190] sm:$0xff]
    %v113 = vld [vmem:[#allocation5 + $0x198] sm:$0xff]
    %v114 = vld [vmem:[#allocation5 + $0x1a0] sm:$0xff]
    %v115 = vld [vmem:[#allocation5 + $0x1a8] sm:$0xff]
    %v116 = vld [vmem:[#allocation5 + $0x1b0] sm:$0xff]
    %v117 = vld [vmem:[#allocation5 + $0x1b8] sm:$0xff]
    %v118 = vld [vmem:[#allocation5 + $0x1c0] sm:$0xff]
    %v119 = vld [vmem:[#allocation5 + $0x1c8] sm:$0xff]
    %v120 = vld [vmem:[#allocation5 + $0x1d0] sm:$0xff]
    %v121 = vld [vmem:[#allocation5 + $0x1d8] sm:$0xff]
    %v122 = vld [vmem:[#allocation5 + $0x1e0] sm:$0xff]
    %v123 = vld [vmem:[#allocation5 + $0x1e8] sm:$0xff]
    %v124 = vld [vmem:[#allocation5 + $0x1f0] sm:$0xff]
    %v125 = vld [vmem:[#allocation5 + $0x1f8] sm:$0xff]
    %v126 = vld [vmem:[#allocation5 + $0x200] sm:$0xff]
    %v127 = vld [vmem:[#allocation5 + $0x208] sm:$0xff]
    %v128 = vld [vmem:[#allocation5 + $0x210] sm:$0xff]
    %v129 = vld [vmem:[#allocation5 + $0x218] sm:$0xff]
    %v130 = vld [vmem:[#allocation5 + $0x220] sm:$0xff]
    %v131 = vld [vmem:[#allocation5 + $0x228] sm:$0xff]
    %v132 = vld [vmem:[#allocation5 + $0x230] sm:$0xff]
    %v133 = vld [vmem:[#allocation5 + $0x238] sm:$0xff]
    %v134 = vld [vmem:[#allocation5 + $0x240] sm:$0xff]
    %v135 = vld [vmem:[#allocation5 + $0x248] sm:$0xff]
    %v136 = vld [vmem:[#allocation5 + $0x250] sm:$0xff]
    %v137 = vld [vmem:[#allocation5 + $0x258] sm:$0xff]
    %v138 = vld [vmem:[#allocation5 + $0x260] sm:$0xff]
    %v139 = vld [vmem:[#allocation5 + $0x268] sm:$0xff]
    %v140 = vld [vmem:[#allocation5 + $0x270] sm:$0xff]
    %v141 = vld [vmem:[#allocation5 + $0x278] sm:$0xff]
    %v142 = vld [vmem:[#allocation5 + $0x280] sm:$0xff]
    %v143 = vld [vmem:[#allocation5 + $0x288] sm:$0xff]
    %v144 = vld [vmem:[#allocation5 + $0x290] sm:$0xff]
    %v145 = vld [vmem:[#allocation5 + $0x298] sm:$0xff]
    %v146 = vld [vmem:[#allocation5 + $0x2a0] sm:$0xff]
    %v147 = vld [vmem:[#allocation5 + $0x2a8] sm:$0xff]
    %v148 = vld [vmem:[#allocation5 + $0x2b0] sm:$0xff]
    %v149 = vld [vmem:[#allocation5 + $0x2b8] sm:$0xff]
    %v150 = vld [vmem:[#allocation5 + $0x2c0] sm:$0xff]
    %v151 = vld [vmem:[#allocation5 + $0x2c8] sm:$0xff]
    %v152 = vld [vmem:[#allocation5 + $0x2d0] sm:$0xff]
    %v153 = vld [vmem:[#allocation5 + $0x2d8] sm:$0xff]
    %v154 = vld [vmem:[#allocation5 + $0x2e0] sm:$0xff]
    %v155 = vld [vmem:[#allocation5 + $0x2e8] sm:$0xff]
    %v156 = vld [vmem:[#allocation5 + $0x2f0] sm:$0xff]
    %v157 = vld [vmem:[#allocation5 + $0x2f8] sm:$0xff]
    %v158 = vld [vmem:[#allocation5 + $0x300] sm:$0xff]
    %v159 = vld [vmem:[#allocation5 + $0x308] sm:$0xff]
    %v160 = vld [vmem:[#allocation5 + $0x310] sm:$0xff]
    %v161 = vld [vmem:[#allocation5 + $0x318] sm:$0xff]
    %v162 = vld [vmem:[#allocation5 + $0x320] sm:$0xff]
    %v163 = vld [vmem:[#allocation5 + $0x328] sm:$0xff]
    %v164 = vld [vmem:[#allocation5 + $0x330] sm:$0xff]
    %v165 = vld [vmem:[#allocation5 + $0x338] sm:$0xff]
    %v166 = vld [vmem:[#allocation5 + $0x340] sm:$0xff]
    %v167 = vld [vmem:[#allocation5 + $0x348] sm:$0xff]
    %v168 = vld [vmem:[#allocation5 + $0x350] sm:$0xff]
    %v169 = vld [vmem:[#allocation5 + $0x358] sm:$0xff]
    %v170 = vld [vmem:[#allocation5 + $0x360] sm:$0xff]
    %v171 = vld [vmem:[#allocation5 + $0x368] sm:$0xff]
    %v172 = vld [vmem:[#allocation5 + $0x370] sm:$0xff]
    %v173 = vld [vmem:[#allocation5 + $0x378] sm:$0xff]
    %v174 = vld [vmem:[#allocation5 + $0x380] sm:$0xff]
    %v175 = vld [vmem:[#allocation5 + $0x388] sm:$0xff]
    %v176 = vld [vmem:[#allocation5 + $0x390] sm:$0xff]
    %v177 = vld [vmem:[#allocation5 + $0x398] sm:$0xff]
    %v178 = vld [vmem:[#allocation5 + $0x3a0] sm:$0xff]
    %v179 = vld [vmem:[#allocation5 + $0x3a8] sm:$0xff]
    %v180 = vld [vmem:[#allocation5 + $0x3b0] sm:$0xff]
    %v181 = vld [vmem:[#allocation5 + $0x3b8] sm:$0xff]
    %v182 = vld [vmem:[#allocation5 + $0x3c0] sm:$0xff]
    %v183 = vld [vmem:[#allocation5 + $0x3c8] sm:$0xff]
    %v184 = vld [vmem:[#allocation5 + $0x3d0] sm:$0xff]
    %v185 = vld [vmem:[#allocation5 + $0x3d8] sm:$0xff]
    %v186 = vld [vmem:[#allocation5 + $0x3e0] sm:$0xff]
    %v187 = vld [vmem:[#allocation5 + $0x3e8] sm:$0xff]
    %v188 = vld [vmem:[#allocation5 + $0x3f0] sm:$0xff]
    %v189 = vld [vmem:[#allocation5 + $0x3f8] sm:$0xff]
    %v190 = vld [vmem:[#allocation5 + $0x400] sm:$0xff]
    %v191 = vld [vmem:[#allocation5 + $0x408] sm:$0xff]
    %v192 = vld [vmem:[#allocation5 + $0x410] sm:$0xff]
    %v193 = vld [vmem:[#allocation5 + $0x418] sm:$0xff]
    %v194 = vld [vmem:[#allocation5 + $0x420] sm:$0xff]
    %v195 = vld [vmem:[#allocation5 + $0x428] sm:$0xff]
    %v196 = vld [vmem:[#allocation5 + $0x430] sm:$0xff]
    %v197 = vld [vmem:[#allocation5 + $0x438] sm:$0xff]
    %v198 = vld [vmem:[#allocation5 + $0x440] sm:$0xff]
    %v199 = vld [vmem:[#allocation5 + $0x448] sm:$0xff]
    %v200 = vld [vmem:[#allocation5 + $0x450] sm:$0xff]
    %v201 = vld [vmem:[#allocation5 + $0x458] sm:$0xff]
    %v202 = vld [vmem:[#allocation5 + $0x460] sm:$0xff]
    %v203 = vld [vmem:[#allocation5 + $0x468] sm:$0xff]
    %v204 = vld [vmem:[#allocation5 + $0x470] sm:$0xff]
    %v205 = vld [vmem:[#allocation5 + $0x478] sm:$0xff]
    %v206 = vld [vmem:[#allocation5 + $0x480] sm:$0xff]
    %v207 = vld [vmem:[#allocation5 + $0x488] sm:$0xff]
    %v208 = vld [vmem:[#allocation5 + $0x490] sm:$0xff]
    %v209 = vld [vmem:[#allocation5 + $0x498] sm:$0xff]
    %v210 = vld [vmem:[#allocation5 + $0x4a0] sm:$0xff]
    %v211 = vld [vmem:[#allocation5 + $0x4a8] sm:$0xff]
    %v212 = vld [vmem:[#allocation5 + $0x4b0] sm:$0xff]
    %v213 = vld [vmem:[#allocation5 + $0x4b8] sm:$0xff]
    %v214 = vld [vmem:[#allocation5 + $0x4c0] sm:$0xff]
    %v215 = vld [vmem:[#allocation5 + $0x4c8] sm:$0xff]
    %v216 = vld [vmem:[#allocation5 + $0x4d0] sm:$0xff]
    %v217 = vld [vmem:[#allocation5 + $0x4d8] sm:$0xff]
    %v218 = vld [vmem:[#allocation5 + $0x4e0] sm:$0xff]
    %v219 = vld [vmem:[#allocation5 + $0x4e8] sm:$0xff]
    %v220 = vld [vmem:[#allocation5 + $0x4f0] sm:$0xff]
    %v221 = vld [vmem:[#allocation5 + $0x4f8] sm:$0xff]
    %v222 = vld [vmem:[#allocation5 + $0x500] sm:$0xff]
    %v223 = vld [vmem:[#allocation5 + $0x508] sm:$0xff]
    %v224 = vld [vmem:[#allocation5 + $0x510] sm:$0xff]
    %v225 = vld [vmem:[#allocation5 + $0x518] sm:$0xff]
    %v226 = vld [vmem:[#allocation5 + $0x520] sm:$0xff]
    %v227 = vld [vmem:[#allocation5 + $0x528] sm:$0xff]
    %v228 = vld [vmem:[#allocation5 + $0x530] sm:$0xff]
    %v229 = vld [vmem:[#allocation5 + $0x538] sm:$0xff]
    %v230 = vld [vmem:[#allocation5 + $0x540] sm:$0xff]
    %v231 = vld [vmem:[#allocation5 + $0x548] sm:$0xff]
    %v232 = vld [vmem:[#allocation5 + $0x550] sm:$0xff]
    %v233 = vld [vmem:[#allocation5 + $0x558] sm:$0xff]
    %v234 = vld [vmem:[#allocation5 + $0x560] sm:$0xff]
    %v235 = vld [vmem:[#allocation5 + $0x568] sm:$0xff]
    %v236 = vld [vmem:[#allocation5 + $0x570] sm:$0xff]
    %v237 = vld [vmem:[#allocation5 + $0x578] sm:$0xff]
    %v238 = vld [vmem:[#allocation5 + $0x580] sm:$0xff]
    %v239 = vld [vmem:[#allocation5 + $0x588] sm:$0xff]
    %v240 = vld [vmem:[#allocation5 + $0x590] sm:$0xff]
    %v241 = vld [vmem:[#allocation5 + $0x598] sm:$0xff]
    %v242 = vld [vmem:[#allocation5 + $0x5a0] sm:$0xff]
    %v243 = vld [vmem:[#allocation5 + $0x5a8] sm:$0xff]
    %v244 = vld [vmem:[#allocation5 + $0x5b0] sm:$0xff]
    %v245 = vld [vmem:[#allocation5 + $0x5b8] sm:$0xff]
    %v246 = vld [vmem:[#allocation5 + $0x5c0] sm:$0xff]
    %v247 = vld [vmem:[#allocation5 + $0x5c8] sm:$0xff]
    %v248 = vld [vmem:[#allocation5 + $0x5d0] sm:$0xff]
    %v249 = vld [vmem:[#allocation5 + $0x5d8] sm:$0xff]
    %v250 = vld [vmem:[#allocation5 + $0x5e0] sm:$0xff]
    %v251 = vld [vmem:[#allocation5 + $0x5e8] sm:$0xff]
    %v252 = vld [vmem:[#allocation5 + $0x5f0] sm:$0xff]
    %v253 = vld [vmem:[#allocation5 + $0x5f8] sm:$0xff]
    %v254 = vld [vmem:[#allocation5 + $0x600] sm:$0xff]
    %v255 = vld [vmem:[#allocation5 + $0x608] sm:$0xff]
    %v256 = vld [vmem:[#allocation5 + $0x610] sm:$0xff]
    %v257 = vld [vmem:[#allocation5 + $0x618] sm:$0xff]
    %v258 = vld [vmem:[#allocation5 + $0x620] sm:$0xff]
    %v259 = vld [vmem:[#allocation5 + $0x628] sm:$0xff]
    %v260 = vld [vmem:[#allocation5 + $0x630] sm:$0xff]
    %v261 = vld [vmem:[#allocation5 + $0x638] sm:$0xff]
    %v262 = vld [vmem:[#allocation5 + $0x640] sm:$0xff]
    %v263 = vld [vmem:[#allocation5 + $0x648] sm:$0xff]
    %v264 = vld [vmem:[#allocation5 + $0x650] sm:$0xff]
    %v265 = vld [vmem:[#allocation5 + $0x658] sm:$0xff]
    %v266 = vld [vmem:[#allocation5 + $0x660] sm:$0xff]
    %v267 = vld [vmem:[#allocation5 + $0x668] sm:$0xff]
    %v268 = vld [vmem:[#allocation5 + $0x670] sm:$0xff]
    %v269 = vld [vmem:[#allocation5 + $0x678] sm:$0xff]
    %v270 = vld [vmem:[#allocation5 + $0x680] sm:$0xff]
    %v271 = vld [vmem:[#allocation5 + $0x688] sm:$0xff]
    %v272 = vld [vmem:[#allocation5 + $0x690] sm:$0xff]
    %v273 = vld [vmem:[#allocation5 + $0x698] sm:$0xff]
    %v274 = vld [vmem:[#allocation5 + $0x6a0] sm:$0xff]
    %v275 = vld [vmem:[#allocation5 + $0x6a8] sm:$0xff]
    %v276 = vld [vmem:[#allocation5 + $0x6b0] sm:$0xff]
    %v277 = vld [vmem:[#allocation5 + $0x6b8] sm:$0xff]
    %v278 = vld [vmem:[#allocation5 + $0x6c0] sm:$0xff]
    %v279 = vld [vmem:[#allocation5 + $0x6c8] sm:$0xff]
    %v280 = vld [vmem:[#allocation5 + $0x6d0] sm:$0xff]
    %v281 = vld [vmem:[#allocation5 + $0x6d8] sm:$0xff]
    %v282 = vld [vmem:[#allocation5 + $0x6e0] sm:$0xff]
    %v283 = vld [vmem:[#allocation5 + $0x6e8] sm:$0xff]
    %v284 = vld [vmem:[#allocation5 + $0x6f0] sm:$0xff]
    %v285 = vld [vmem:[#allocation5 + $0x6f8] sm:$0xff]
    %v286 = vld [vmem:[#allocation5 + $0x700] sm:$0xff]
    %v287 = vld [vmem:[#allocation5 + $0x708] sm:$0xff]
    %v288 = vld [vmem:[#allocation5 + $0x710] sm:$0xff]
    %v289 = vld [vmem:[#allocation5 + $0x718] sm:$0xff]
    %v290 = vld [vmem:[#allocation5 + $0x720] sm:$0xff]
    %v291 = vld [vmem:[#allocation5 + $0x728] sm:$0xff]
    %v292 = vld [vmem:[#allocation5 + $0x730] sm:$0xff]
    %v293 = vld [vmem:[#allocation5 + $0x738] sm:$0xff]
    %v294 = vld [vmem:[#allocation5 + $0x740] sm:$0xff]
    %v295 = vld [vmem:[#allocation5 + $0x748] sm:$0xff]
    %v296 = vld [vmem:[#allocation5 + $0x750] sm:$0xff]
    %v297 = vld [vmem:[#allocation5 + $0x758] sm:$0xff]
    %v298 = vld [vmem:[#allocation5 + $0x760] sm:$0xff]
    %v299 = vld [vmem:[#allocation5 + $0x768] sm:$0xff]
    %v300 = vld [vmem:[#allocation5 + $0x770] sm:$0xff]
    %v301 = vld [vmem:[#allocation5 + $0x778] sm:$0xff]
    %v302 = vld [vmem:[#allocation5 + $0x780] sm:$0xff]
    %v303 = vld [vmem:[#allocation5 + $0x788] sm:$0xff]
    %v304 = vld [vmem:[#allocation5 + $0x790] sm:$0xff]
    %v305 = vld [vmem:[#allocation5 + $0x798] sm:$0xff]
    %v306 = vld [vmem:[#allocation5 + $0x7a0] sm:$0xff]
    %v307 = vld [vmem:[#allocation5 + $0x7a8] sm:$0xff]
    %v308 = vld [vmem:[#allocation5 + $0x7b0] sm:$0xff]
    %v309 = vld [vmem:[#allocation5 + $0x7b8] sm:$0xff]
    %v310 = vld [vmem:[#allocation5 + $0x7c0] sm:$0xff]
    %v311 = vld [vmem:[#allocation5 + $0x7c8] sm:$0xff]
    %v312 = vld [vmem:[#allocation5 + $0x7d0] sm:$0xff]
    %v313 = vld [vmem:[#allocation5 + $0x7d8] sm:$0xff]
    %v314 = vld [vmem:[#allocation5 + $0x7e0] sm:$0xff]
    %v315 = vld [vmem:[#allocation5 + $0x7e8] sm:$0xff]
    %v316 = vld [vmem:[#allocation5 + $0x7f0] sm:$0xff]
    %v317 = vld [vmem:[#allocation5 + $0x7f8] sm:$0xff]
    %v318 = vld [vmem:[#allocation5 + $0x800] sm:$0xff]
    %v319 = vld [vmem:[#allocation5 + $0x808] sm:$0xff]
    %v320 = vld [vmem:[#allocation5 + $0x810] sm:$0xff]
    %v321 = vld [vmem:[#allocation5 + $0x818] sm:$0xff]
    %v322 = vld [vmem:[#allocation5 + $0x820] sm:$0xff]
    %v323 = vld [vmem:[#allocation5 + $0x828] sm:$0xff]
    %v324 = vld [vmem:[#allocation5 + $0x830] sm:$0xff]
    %v325 = vld [vmem:[#allocation5 + $0x838] sm:$0xff]
    %v326 = vld [vmem:[#allocation5 + $0x840] sm:$0xff]
    %v327 = vld [vmem:[#allocation5 + $0x848] sm:$0xff]
    %v328 = vld [vmem:[#allocation5 + $0x850] sm:$0xff]
    %v329 = vld [vmem:[#allocation5 + $0x858] sm:$0xff]
    %v330 = vld [vmem:[#allocation5 + $0x860] sm:$0xff]
    %v331 = vld [vmem:[#allocation5 + $0x868] sm:$0xff]
    %v332 = vld [vmem:[#allocation5 + $0x870] sm:$0xff]
    %v333 = vld [vmem:[#allocation5 + $0x878] sm:$0xff]
    %v334 = vld [vmem:[#allocation5 + $0x880] sm:$0xff]
    %v335 = vld [vmem:[#allocation5 + $0x888] sm:$0xff]
    %v336 = vld [vmem:[#allocation5 + $0x890] sm:$0xff]
    %v337 = vld [vmem:[#allocation5 + $0x898] sm:$0xff]
    %v338 = vld [vmem:[#allocation5 + $0x8a0] sm:$0xff]
    %v339 = vld [vmem:[#allocation5 + $0x8a8] sm:$0xff]
    %v340 = vld [vmem:[#allocation5 + $0x8b0] sm:$0xff]
    %v341 = vld [vmem:[#allocation5 + $0x8b8] sm:$0xff]
    %v342 = vld [vmem:[#allocation5 + $0x8c0] sm:$0xff]
    %v343 = vld [vmem:[#allocation5 + $0x8c8] sm:$0xff]
    %v344 = vld [vmem:[#allocation5 + $0x8d0] sm:$0xff]
    %v345 = vld [vmem:[#allocation5 + $0x8d8] sm:$0xff]
    %v346 = vld [vmem:[#allocation5 + $0x8e0] sm:$0xff]
    %v347 = vld [vmem:[#allocation5 + $0x8e8] sm:$0xff]
    %v348 = vld [vmem:[#allocation5 + $0x8f0] sm:$0xff]
    %v349 = vld [vmem:[#allocation5 + $0x8f8] sm:$0xff]
    %v350 = vld [vmem:[#allocation5 + $0x900] sm:$0xff]
    %v351 = vld [vmem:[#allocation5 + $0x908] sm:$0xff]
    %v352 = vld [vmem:[#allocation5 + $0x910] sm:$0xff]
    %v353 = vld [vmem:[#allocation5 + $0x918] sm:$0xff]
    %v354 = vld [vmem:[#allocation5 + $0x920] sm:$0xff]
    %v355 = vld [vmem:[#allocation5 + $0x928] sm:$0xff]
    %v356 = vld [vmem:[#allocation5 + $0x930] sm:$0xff]
    %v357 = vld [vmem:[#allocation5 + $0x938] sm:$0xff]
    %v358 = vld [vmem:[#allocation5 + $0x940] sm:$0xff]
    %v359 = vld [vmem:[#allocation5 + $0x948] sm:$0xff]
    %v360 = vld [vmem:[#allocation5 + $0x950] sm:$0xff]
    %v361 = vld [vmem:[#allocation5 + $0x958] sm:$0xff]
    %v362 = vld [vmem:[#allocation5 + $0x960] sm:$0xff]
    %v363 = vld [vmem:[#allocation5 + $0x968] sm:$0xff]
    %v364 = vld [vmem:[#allocation5 + $0x970] sm:$0xff]
    %v365 = vld [vmem:[#allocation5 + $0x978] sm:$0xff]
    %v366 = vld [vmem:[#allocation5 + $0x980] sm:$0xff]
    %v367 = vld [vmem:[#allocation5 + $0x988] sm:$0xff]
    %v368 = vld [vmem:[#allocation5 + $0x990] sm:$0xff]
    %v369 = vld [vmem:[#allocation5 + $0x998] sm:$0xff]
    %v370 = vld [vmem:[#allocation5 + $0x9a0] sm:$0xff]
    %v371 = vld [vmem:[#allocation5 + $0x9a8] sm:$0xff]
    %v372 = vld [vmem:[#allocation5 + $0x9b0] sm:$0xff]
    %v373 = vld [vmem:[#allocation5 + $0x9b8] sm:$0xff]
    %v374 = vld [vmem:[#allocation5 + $0x9c0] sm:$0xff]
    %v375 = vld [vmem:[#allocation5 + $0x9c8] sm:$0xff]
    %v376 = vld [vmem:[#allocation5 + $0x9d0] sm:$0xff]
    %v377 = vld [vmem:[#allocation5 + $0x9d8] sm:$0xff]
    %v378 = vld [vmem:[#allocation5 + $0x9e0] sm:$0xff]
    %v379 = vld [vmem:[#allocation5 + $0x9e8] sm:$0xff]
    %v380 = vld [vmem:[#allocation5 + $0x9f0] sm:$0xff]
    %v381 = vld [vmem:[#allocation5 + $0x9f8] sm:$0xff]
    %v382 = vld [vmem:[#allocation5 + $0xa00] sm:$0xff]
    %v383 = vld [vmem:[#allocation5 + $0xa08] sm:$0xff]
    %v384 = vld [vmem:[#allocation5 + $0xa10] sm:$0xff]
    %v385 = vld [vmem:[#allocation5 + $0xa18] sm:$0xff]
    %v386 = vld [vmem:[#allocation5 + $0xa20] sm:$0xff]
    %v387 = vld [vmem:[#allocation5 + $0xa28] sm:$0xff]
    %v388 = vld [vmem:[#allocation5 + $0xa30] sm:$0xff]
    %v389 = vld [vmem:[#allocation5 + $0xa38] sm:$0xff]
    %v390 = vld [vmem:[#allocation5 + $0xa40] sm:$0xff]
    %v391 = vld [vmem:[#allocation5 + $0xa48] sm:$0xff]
    %v392 = vld [vmem:[#allocation5 + $0xa50] sm:$0xff]
    %v393 = vld [vmem:[#allocation5 + $0xa58] sm:$0xff]
    %v394 = vld [vmem:[#allocation5 + $0xa60] sm:$0xff]
    %v395 = vld [vmem:[#allocation5 + $0xa68] sm:$0xff]
    %v396 = vld [vmem:[#allocation5 + $0xa70] sm:$0xff]
    %v397 = vld [vmem:[#allocation5 + $0xa78] sm:$0xff]
    %v398 = vld [vmem:[#allocation5 + $0xa80] sm:$0xff]
    %v399 = vld [vmem:[#allocation5 + $0xa88] sm:$0xff]
    %v400 = vld [vmem:[#allocation5 + $0xa90] sm:$0xff]
    %v401 = vld [vmem:[#allocation5 + $0xa98] sm:$0xff]
    %v402 = vld [vmem:[#allocation5 + $0xaa0] sm:$0xff]
    %v403 = vld [vmem:[#allocation5 + $0xaa8] sm:$0xff]
    %v404 = vld [vmem:[#allocation5 + $0xab0] sm:$0xff]
    %v405 = vld [vmem:[#allocation5 + $0xab8] sm:$0xff]
    %v406 = vld [vmem:[#allocation5 + $0xac0] sm:$0xff]
    %v407 = vld [vmem:[#allocation5 + $0xac8] sm:$0xff]
    %v408 = vld [vmem:[#allocation5 + $0xad0] sm:$0xff]
    %v409 = vld [vmem:[#allocation5 + $0xad8] sm:$0xff]
    %v410 = vld [vmem:[#allocation5 + $0xae0] sm:$0xff]
    %v411 = vld [vmem:[#allocation5 + $0xae8] sm:$0xff]
    %v412 = vld [vmem:[#allocation5 + $0xaf0] sm:$0xff]
    %v413 = vld [vmem:[#allocation5 + $0xaf8] sm:$0xff]
    %v414 = vld [vmem:[#allocation5 + $0xb00] sm:$0xff]
    %v415 = vld [vmem:[#allocation5 + $0xb08] sm:$0xff]
    %v416 = vld [vmem:[#allocation5 + $0xb10] sm:$0xff]
    %v417 = vld [vmem:[#allocation5 + $0xb18] sm:$0xff]
    %v418 = vld [vmem:[#allocation5 + $0xb20] sm:$0xff]
    %v419 = vld [vmem:[#allocation5 + $0xb28] sm:$0xff]
    %v420 = vld [vmem:[#allocation5 + $0xb30] sm:$0xff]
    %v421 = vld [vmem:[#allocation5 + $0xb38] sm:$0xff]
    %v422 = vld [vmem:[#allocation5 + $0xb40] sm:$0xff]
    %v423 = vld [vmem:[#allocation5 + $0xb48] sm:$0xff]
    %v424 = vld [vmem:[#allocation5 + $0xb50] sm:$0xff]
    %v425 = vld [vmem:[#allocation5 + $0xb58] sm:$0xff]
    %v426 = vld [vmem:[#allocation5 + $0xb60] sm:$0xff]
    %v427 = vld [vmem:[#allocation5 + $0xb68] sm:$0xff]
    %v428 = vld [vmem:[#allocation5 + $0xb70] sm:$0xff]
    %v429 = vld [vmem:[#allocation5 + $0xb78] sm:$0xff]
    %v430 = vld [vmem:[#allocation5 + $0xb80] sm:$0xff]
    %v431 = vld [vmem:[#allocation5 + $0xb88] sm:$0xff]
    %v432 = vld [vmem:[#allocation5 + $0xb90] sm:$0xff]
    %v433 = vld [vmem:[#allocation5 + $0xb98] sm:$0xff]
    %v434 = vld [vmem:[#allocation5 + $0xba0] sm:$0xff]
    %v435 = vld [vmem:[#allocation5 + $0xba8] sm:$0xff]
    %v436 = vld [vmem:[#allocation5 + $0xbb0] sm:$0xff]
    %v437 = vld [vmem:[#allocation5 + $0xbb8] sm:$0xff]
    %v438 = vld [vmem:[#allocation5 + $0xbc0] sm:$0xff]
    %v439 = vld [vmem:[#allocation5 + $0xbc8] sm:$0xff]
    %v440 = vld [vmem:[#allocation5 + $0xbd0] sm:$0xff]
    %v441 = vld [vmem:[#allocation5 + $0xbd8] sm:$0xff]
    %v442 = vld [vmem:[#allocation5 + $0xbe0] sm:$0xff]
    %v443 = vld [vmem:[#allocation5 + $0xbe8] sm:$0xff]
    %v444 = vld [vmem:[#allocation5 + $0xbf0] sm:$0xff]
    %v445 = vld [vmem:[#allocation5 + $0xbf8] sm:$0xff]
    %v446 = vld [vmem:[#allocation5 + $0xc00] sm:$0xff]
    %v447 = vld [vmem:[#allocation5 + $0xc08] sm:$0xff]
    %v448 = vld [vmem:[#allocation5 + $0xc10] sm:$0xff]
    %v449 = vld [vmem:[#allocation5 + $0xc18] sm:$0xff]
    %v450 = vld [vmem:[#allocation5 + $0xc20] sm:$0xff]
    %v451 = vld [vmem:[#allocation5 + $0xc28] sm:$0xff]
    %v452 = vld [vmem:[#allocation5 + $0xc30] sm:$0xff]
    %v453 = vld [vmem:[#allocation5 + $0xc38] sm:$0xff]
    %v454 = vld [vmem:[#allocation5 + $0xc40] sm:$0xff]
    %v455 = vld [vmem:[#allocation5 + $0xc48] sm:$0xff]
    %v456 = vld [vmem:[#allocation5 + $0xc50] sm:$0xff]
    %v457 = vld [vmem:[#allocation5 + $0xc58] sm:$0xff]
    %v458 = vld [vmem:[#allocation5 + $0xc60] sm:$0xff]
    %v459 = vld [vmem:[#allocation5 + $0xc68] sm:$0xff]
    %v460 = vld [vmem:[#allocation5 + $0xc70] sm:$0xff]
    %v461 = vld [vmem:[#allocation5 + $0xc78] sm:$0xff]
    %v462 = vld [vmem:[#allocation5 + $0xc80] sm:$0xff]
    %v463 = vld [vmem:[#allocation5 + $0xc88] sm:$0xff]
    %v464 = vld [vmem:[#allocation5 + $0xc90] sm:$0xff]
    %v465 = vld [vmem:[#allocation5 + $0xc98] sm:$0xff]
    %v466 = vld [vmem:[#allocation5 + $0xca0] sm:$0xff]
    %v467 = vld [vmem:[#allocation5 + $0xca8] sm:$0xff]
    %v468 = vld [vmem:[#allocation5 + $0xcb0] sm:$0xff]
    %v469 = vld [vmem:[#allocation5 + $0xcb8] sm:$0xff]
    %v470 = vld [vmem:[#allocation5 + $0xcc0] sm:$0xff]
    %v471 = vld [vmem:[#allocation5 + $0xcc8] sm:$0xff]
    %v472 = vld [vmem:[#allocation5 + $0xcd0] sm:$0xff]
    %v473 = vld [vmem:[#allocation5 + $0xcd8] sm:$0xff]
    %v474 = vld [vmem:[#allocation5 + $0xce0] sm:$0xff]
    %v475 = vld [vmem:[#allocation5 + $0xce8] sm:$0xff]
    %v476 = vld [vmem:[#allocation5 + $0xcf0] sm:$0xff]
    %v477 = vld [vmem:[#allocation5 + $0xcf8] sm:$0xff]
    %v478 = vld [vmem:[#allocation5 + $0xd00] sm:$0xff]
    %v479 = vld [vmem:[#allocation5 + $0xd08] sm:$0xff]
    %v480 = vld [vmem:[#allocation5 + $0xd10] sm:$0xff]
    %v481 = vld [vmem:[#allocation5 + $0xd18] sm:$0xff]
    %v482 = vld [vmem:[#allocation5 + $0xd20] sm:$0xff]
    %v483 = vld [vmem:[#allocation5 + $0xd28] sm:$0xff]
    %v484 = vld [vmem:[#allocation5 + $0xd30] sm:$0xff]
    %v485 = vld [vmem:[#allocation5 + $0xd38] sm:$0xff]
    %v486 = vld [vmem:[#allocation5 + $0xd40] sm:$0xff]
    %v487 = vld [vmem:[#allocation5 + $0xd48] sm:$0xff]
    %v488 = vld [vmem:[#allocation5 + $0xd50] sm:$0xff]
    %v489 = vld [vmem:[#allocation5 + $0xd58] sm:$0xff]
    %v490 = vld [vmem:[#allocation5 + $0xd60] sm:$0xff]
    %v491 = vld [vmem:[#allocation5 + $0xd68] sm:$0xff]
    %v492 = vld [vmem:[#allocation5 + $0xd70] sm:$0xff]
    %v493 = vld [vmem:[#allocation5 + $0xd78] sm:$0xff]
    %v494 = vld [vmem:[#allocation5 + $0xd80] sm:$0xff]
    %v495 = vld [vmem:[#allocation5 + $0xd88] sm:$0xff]
    %v496 = vld [vmem:[#allocation5 + $0xd90] sm:$0xff]
    %v497 = vld [vmem:[#allocation5 + $0xd98] sm:$0xff]
    %v498 = vld [vmem:[#allocation5 + $0xda0] sm:$0xff]
    %v499 = vld [vmem:[#allocation5 + $0xda8] sm:$0xff]
    %v500 = vld [vmem:[#allocation5 + $0xdb0] sm:$0xff]
    %v501 = vld [vmem:[#allocation5 + $0xdb8] sm:$0xff]
    %v502 = vld [vmem:[#allocation5 + $0xdc0] sm:$0xff]
    %v503 = vld [vmem:[#allocation5 + $0xdc8] sm:$0xff]
    %v504 = vld [vmem:[#allocation5 + $0xdd0] sm:$0xff]
    %v505 = vld [vmem:[#allocation5 + $0xdd8] sm:$0xff]
    %v506 = vld [vmem:[#allocation5 + $0xde0] sm:$0xff]
    %v507 = vld [vmem:[#allocation5 + $0xde8] sm:$0xff]
    %v508 = vld [vmem:[#allocation5 + $0xdf0] sm:$0xff]
    %v509 = vld [vmem:[#allocation5 + $0xdf8] sm:$0xff]
    %v510 = vld [vmem:[#allocation5 + $0xe00] sm:$0xff]
    %v511 = vld [vmem:[#allocation5 + $0xe08] sm:$0xff]
    %v512 = vld [vmem:[#allocation5 + $0xe10] sm:$0xff]
    %v513 = vld [vmem:[#allocation5 + $0xe18] sm:$0xff]
    %v514 = vld [vmem:[#allocation5 + $0xe20] sm:$0xff]
    %v515 = vld [vmem:[#allocation5 + $0xe28] sm:$0xff]
    %v516 = vld [vmem:[#allocation5 + $0xe30] sm:$0xff]
    %v517 = vld [vmem:[#allocation5 + $0xe38] sm:$0xff]
    %v518 = vld [vmem:[#allocation5 + $0xe40] sm:$0xff]
    %v519 = vld [vmem:[#allocation5 + $0xe48] sm:$0xff]
    %v520 = vld [vmem:[#allocation5 + $0xe50] sm:$0xff]
    %v521 = vld [vmem:[#allocation5 + $0xe58] sm:$0xff]
    %v522 = vld [vmem:[#allocation5 + $0xe60] sm:$0xff]
    %v523 = vld [vmem:[#allocation5 + $0xe68] sm:$0xff]
    %v524 = vld [vmem:[#allocation5 + $0xe70] sm:$0xff]
    %v525 = vld [vmem:[#allocation5 + $0xe78] sm:$0xff]
    %v526 = vld [vmem:[#allocation5 + $0xe80] sm:$0xff]
    %v527 = vld [vmem:[#allocation5 + $0xe88] sm:$0xff]
    %v528 = vld [vmem:[#allocation5 + $0xe90] sm:$0xff]
    %v529 = vld [vmem:[#allocation5 + $0xe98] sm:$0xff]
    %v530 = vld [vmem:[#allocation5 + $0xea0] sm:$0xff]
    %v531 = vld [vmem:[#allocation5 + $0xea8] sm:$0xff]
    %v532 = vld [vmem:[#allocation5 + $0xeb0] sm:$0xff]
    %v533 = vld [vmem:[#allocation5 + $0xeb8] sm:$0xff]
    %v534 = vld [vmem:[#allocation5 + $0xec0] sm:$0xff]
    %v535 = vld [vmem:[#allocation5 + $0xec8] sm:$0xff]
    %v536 = vld [vmem:[#allocation5 + $0xed0] sm:$0xff]
    %v537 = vld [vmem:[#allocation5 + $0xed8] sm:$0xff]
    %v538 = vld [vmem:[#allocation5 + $0xee0] sm:$0xff]
    %v539 = vld [vmem:[#allocation5 + $0xee8] sm:$0xff]
    %v540 = vld [vmem:[#allocation5 + $0xef0] sm:$0xff]
    %v541 = vld [vmem:[#allocation5 + $0xef8] sm:$0xff]
    %v542 = vld [vmem:[#allocation5 + $0xf00] sm:$0xff]
    %v543 = vld [vmem:[#allocation5 + $0xf08] sm:$0xff]
    %v544 = vld [vmem:[#allocation5 + $0xf10] sm:$0xff]
    %v545 = vld [vmem:[#allocation5 + $0xf18] sm:$0xff]
    %v546 = vld [vmem:[#allocation5 + $0xf20] sm:$0xff]
    %v547 = vld [vmem:[#allocation5 + $0xf28] sm:$0xff]
    %v548 = vld [vmem:[#allocation5 + $0xf30] sm:$0xff]
    %v549 = vld [vmem:[#allocation5 + $0xf38] sm:$0xff]
    %v550 = vld [vmem:[#allocation5 + $0xf40] sm:$0xff]
    %v551 = vld [vmem:[#allocation5 + $0xf48] sm:$0xff]
    %v552 = vld [vmem:[#allocation5 + $0xf50] sm:$0xff]
    %v553 = vld [vmem:[#allocation5 + $0xf58] sm:$0xff]
    %v554 = vld [vmem:[#allocation5 + $0xf60] sm:$0xff]
    %v555 = vld [vmem:[#allocation5 + $0xf68] sm:$0xff]
    %v556 = vld [vmem:[#allocation5 + $0xf70] sm:$0xff]
    %v557 = vld [vmem:[#allocation5 + $0xf78] sm:$0xff]
    %v558 = vld [vmem:[#allocation5 + $0xf80] sm:$0xff]
    %v559 = vld [vmem:[#allocation5 + $0xf88] sm:$0xff]
    %v560 = vld [vmem:[#allocation5 + $0xf90] sm:$0xff]
    %v561 = vld [vmem:[#allocation5 + $0xf98] sm:$0xff]
    %v562 = vld [vmem:[#allocation5 + $0xfa0] sm:$0xff]
    %v563 = vld [vmem:[#allocation5 + $0xfa8] sm:$0xff]
    %v564 = vld [vmem:[#allocation5 + $0xfb0] sm:$0xff]
    %v565 = vld [vmem:[#allocation5 + $0xfb8] sm:$0xff]
    %v566 = vld [vmem:[#allocation5 + $0xfc0] sm:$0xff]
    %v567 = vld [vmem:[#allocation5 + $0xfc8] sm:$0xff]
    %v568 = vld [vmem:[#allocation5 + $0xfd0] sm:$0xff]
    %v569 = vld [vmem:[#allocation5 + $0xfd8] sm:$0xff]
    %v570 = vld [vmem:[#allocation5 + $0xfe0] sm:$0xff]
    %v571 = vld [vmem:[#allocation5 + $0xfe8] sm:$0xff]
    %v572 = vld [vmem:[#allocation5 + $0xff0] sm:$0xff]
    %v573 = vld [vmem:[#allocation5 + $0xff8] sm:$0xff]
    %v574 = vld [vmem:[#allocation5 + $0x1000] sm:$0xff]
    %v575 = vld [vmem:[#allocation5 + $0x1008] sm:$0xff]
    %v576 = vld [vmem:[#allocation5 + $0x1010] sm:$0xff]
    %v577 = vld [vmem:[#allocation5 + $0x1018] sm:$0xff]
    %v578 = vld [vmem:[#allocation5 + $0x1020] sm:$0xff]
    %v579 = vld [vmem:[#allocation5 + $0x1028] sm:$0xff]
    %v580 = vld [vmem:[#allocation5 + $0x1030] sm:$0xff]
    %v581 = vld [vmem:[#allocation5 + $0x1038] sm:$0xff]
    %v582 = vld [vmem:[#allocation5 + $0x1040] sm:$0xff]
    %v583 = vld [vmem:[#allocation5 + $0x1048] sm:$0xff]
    %v584 = vld [vmem:[#allocation5 + $0x1050] sm:$0xff]
    %v585 = vld [vmem:[#allocation5 + $0x1058] sm:$0xff]
    %v586 = vld [vmem:[#allocation5 + $0x1060] sm:$0xff]
    %v587 = vld [vmem:[#allocation5 + $0x1068] sm:$0xff]
    %v588 = vld [vmem:[#allocation5 + $0x1070] sm:$0xff]
    %v589 = vld [vmem:[#allocation5 + $0x1078] sm:$0xff]
    %v590 = vld [vmem:[#allocation5 + $0x1080] sm:$0xff]
    %v591 = vld [vmem:[#allocation5 + $0x1088] sm:$0xff]
    %v592 = vld [vmem:[#allocation5 + $0x1090] sm:$0xff]
    %v593 = vld [vmem:[#allocation5 + $0x1098] sm:$0xff]
    %v594 = vld [vmem:[#allocation5 + $0x10a0] sm:$0xff]
    %v595 = vld [vmem:[#allocation5 + $0x10a8] sm:$0xff]
    %v596 = vld [vmem:[#allocation5 + $0x10b0] sm:$0xff]
    %v597 = vld [vmem:[#allocation5 + $0x10b8] sm:$0xff]
    %v598 = vld [vmem:[#allocation5 + $0x10c0] sm:$0xff]
    %v599 = vld [vmem:[#allocation5 + $0x10c8] sm:$0xff]
    %v600 = vld [vmem:[#allocation5 + $0x10d0] sm:$0xff]
    %v601 = vld [vmem:[#allocation5 + $0x10d8] sm:$0xff]
    %v602 = vld [vmem:[#allocation5 + $0x10e0] sm:$0xff]
    %v603 = vld [vmem:[#allocation5 + $0x10e8] sm:$0xff]
    %v604 = vld [vmem:[#allocation5 + $0x10f0] sm:$0xff]
    %v605 = vld [vmem:[#allocation5 + $0x10f8] sm:$0xff]
    %v606 = vld [vmem:[#allocation5 + $0x1100] sm:$0xff]
    %v607 = vld [vmem:[#allocation5 + $0x1108] sm:$0xff]
    %v608 = vld [vmem:[#allocation5 + $0x1110] sm:$0xff]
    %v609 = vld [vmem:[#allocation5 + $0x1118] sm:$0xff]
    %v610 = vld [vmem:[#allocation5 + $0x1120] sm:$0xff]
    %v611 = vld [vmem:[#allocation5 + $0x1128] sm:$0xff]
    %v612 = vld [vmem:[#allocation5 + $0x1130] sm:$0xff]
    %v613 = vld [vmem:[#allocation5 + $0x1138] sm:$0xff]
    %v614 = vld [vmem:[#allocation5 + $0x1140] sm:$0xff]
    %v615 = vld [vmem:[#allocation5 + $0x1148] sm:$0xff]
    %v616 = vld [vmem:[#allocation5 + $0x1150] sm:$0xff]
    %v617 = vld [vmem:[#allocation5 + $0x1158] sm:$0xff]
    %v618 = vld [vmem:[#allocation5 + $0x1160] sm:$0xff]
    %v619 = vld [vmem:[#allocation5 + $0x1168] sm:$0xff]
    %v620 = vld [vmem:[#allocation5 + $0x1170] sm:$0xff]
    %v621 = vld [vmem:[#allocation5 + $0x1178] sm:$0xff]
    %v622 = vld [vmem:[#allocation5 + $0x1180] sm:$0xff]
    %v623 = vld [vmem:[#allocation5 + $0x1188] sm:$0xff]
    %v624 = vld [vmem:[#allocation5 + $0x1190] sm:$0xff]
    %v625 = vld [vmem:[#allocation5 + $0x1198] sm:$0xff]
    %v626 = vld [vmem:[#allocation5 + $0x11a0] sm:$0xff]
    %v627 = vld [vmem:[#allocation5 + $0x11a8] sm:$0xff]
    %v628 = vld [vmem:[#allocation5 + $0x11b0] sm:$0xff]
    %v629 = vld [vmem:[#allocation5 + $0x11b8] sm:$0xff]
    %v630 = vld [vmem:[#allocation5 + $0x11c0] sm:$0xff]
    %v631 = vld [vmem:[#allocation5 + $0x11c8] sm:$0xff]
    %v632 = vld [vmem:[#allocation5 + $0x11d0] sm:$0xff]
    %v633 = vld [vmem:[#allocation5 + $0x11d8] sm:$0xff]
    %v634 = vld [vmem:[#allocation5 + $0x11e0] sm:$0xff]
    %v635 = vld [vmem:[#allocation5 + $0x11e8] sm:$0xff]
    %v636 = vld [vmem:[#allocation5 + $0x11f0] sm:$0xff]
    %v637 = vld [vmem:[#allocation5 + $0x11f8] sm:$0xff]
    %v638 = vld [vmem:[#allocation5 + $0x1200] sm:$0xff]
    %v639 = vld [vmem:[#allocation5 + $0x1208] sm:$0xff]
    %v640 = vld [vmem:[#allocation5 + $0x1210] sm:$0xff]
    %v641 = vld [vmem:[#allocation5 + $0x1218] sm:$0xff]
    %v642 = vld [vmem:[#allocation5 + $0x1220] sm:$0xff]
    %v643 = vld [vmem:[#allocation5 + $0x1228] sm:$0xff]
    %v644 = vld [vmem:[#allocation5 + $0x1230] sm:$0xff]
    %v645 = vld [vmem:[#allocation5 + $0x1238] sm:$0xff]
    %v646 = vld [vmem:[#allocation5 + $0x1240] sm:$0xff]
    %v647 = vld [vmem:[#allocation5 + $0x1248] sm:$0xff]
    %v648 = vld [vmem:[#allocation5 + $0x1250] sm:$0xff]
    %v649 = vld [vmem:[#allocation5 + $0x1258] sm:$0xff]
    %v650 = vld [vmem:[#allocation5 + $0x1260] sm:$0xff]
    %v651 = vld [vmem:[#allocation5 + $0x1268] sm:$0xff]
    %v652 = vld [vmem:[#allocation5 + $0x1270] sm:$0xff]
    %v653 = vld [vmem:[#allocation5 + $0x1278] sm:$0xff]
    %v654 = vld [vmem:[#allocation5 + $0x1280] sm:$0xff]
    %v655 = vld [vmem:[#allocation5 + $0x1288] sm:$0xff]
    %v656 = vld [vmem:[#allocation5 + $0x1290] sm:$0xff]
    %v657 = vld [vmem:[#allocation5 + $0x1298] sm:$0xff]
    %v658 = vld [vmem:[#allocation5 + $0x12a0] sm:$0xff]
    %v659 = vld [vmem:[#allocation5 + $0x12a8] sm:$0xff]
    %v660 = vld [vmem:[#allocation5 + $0x12b0] sm:$0xff]
    %v661 = vld [vmem:[#allocation5 + $0x12b8] sm:$0xff]
    %v662 = vld [vmem:[#allocation5 + $0x12c0] sm:$0xff]
    %v663 = vld [vmem:[#allocation5 + $0x12c8] sm:$0xff]
    %v664 = vld [vmem:[#allocation5 + $0x12d0] sm:$0xff]
    %v665 = vld [vmem:[#allocation5 + $0x12d8] sm:$0xff]
    %v666 = vld [vmem:[#allocation5 + $0x12e0] sm:$0xff]
    %v667 = vld [vmem:[#allocation5 + $0x12e8] sm:$0xff]
    %v668 = vld [vmem:[#allocation5 + $0x12f0] sm:$0xff]
    %v669 = vld [vmem:[#allocation5 + $0x12f8] sm:$0xff]
    %v670 = vld [vmem:[#allocation5 + $0x1300] sm:$0xff]
    %v671 = vld [vmem:[#allocation5 + $0x1308] sm:$0xff]
    %v672 = vld [vmem:[#allocation5 + $0x1310] sm:$0xff]
    %v673 = vld [vmem:[#allocation5 + $0x1318] sm:$0xff]
    %v674 = vld [vmem:[#allocation5 + $0x1320] sm:$0xff]
    %v675 = vld [vmem:[#allocation5 + $0x1328] sm:$0xff]
    %v676 = vld [vmem:[#allocation5 + $0x1330] sm:$0xff]
    %v677 = vld [vmem:[#allocation5 + $0x1338] sm:$0xff]
    %v678 = vld [vmem:[#allocation5 + $0x1340] sm:$0xff]
    %v679 = vld [vmem:[#allocation5 + $0x1348] sm:$0xff]
    %v680 = vld [vmem:[#allocation5 + $0x1350] sm:$0xff]
    %v681 = vld [vmem:[#allocation5 + $0x1358] sm:$0xff]
    %v682 = vld [vmem:[#allocation5 + $0x1360] sm:$0xff]
    %v683 = vld [vmem:[#allocation5 + $0x1368] sm:$0xff]
    %v684 = vld [vmem:[#allocation5 + $0x1370] sm:$0xff]
    %v685 = vld [vmem:[#allocation5 + $0x1378] sm:$0xff]
    %v686 = vld [vmem:[#allocation5 + $0x1380] sm:$0xff]
    %v687 = vld [vmem:[#allocation5 + $0x1388] sm:$0xff]
    %v688 = vld [vmem:[#allocation5 + $0x1390] sm:$0xff]
    %v689 = vld [vmem:[#allocation5 + $0x1398] sm:$0xff]
    %v690 = vld [vmem:[#allocation5 + $0x13a0] sm:$0xff]
    %v691 = vld [vmem:[#allocation5 + $0x13a8] sm:$0xff]
    %v692 = vld [vmem:[#allocation5 + $0x13b0] sm:$0xff]
    %v693 = vld [vmem:[#allocation5 + $0x13b8] sm:$0xff]
    %v694 = vld [vmem:[#allocation5 + $0x13c0] sm:$0xff]
    %v695 = vld [vmem:[#allocation5 + $0x13c8] sm:$0xff]
    %v696 = vld [vmem:[#allocation5 + $0x13d0] sm:$0xff]
    %v697 = vld [vmem:[#allocation5 + $0x13d8] sm:$0xff]
    %v698 = vld [vmem:[#allocation5 + $0x13e0] sm:$0xff]
    %v699 = vld [vmem:[#allocation5 + $0x13e8] sm:$0xff]
    %v700 = vld [vmem:[#allocation5 + $0x13f0] sm:$0xff]
    %v701 = vld [vmem:[#allocation5 + $0x13f8] sm:$0xff]
    %v702 = vld [vmem:[#allocation5 + $0x1400] sm:$0xff]
    %v703 = vld [vmem:[#allocation5 + $0x1408] sm:$0xff]
    %v704 = vld [vmem:[#allocation5 + $0x1410] sm:$0xff]
    %v705 = vld [vmem:[#allocation5 + $0x1418] sm:$0xff]
    %v706 = vld [vmem:[#allocation5 + $0x1420] sm:$0xff]
    %v707 = vld [vmem:[#allocation5 + $0x1428] sm:$0xff]
    %v708 = vld [vmem:[#allocation5 + $0x1430] sm:$0xff]
    %v709 = vld [vmem:[#allocation5 + $0x1438] sm:$0xff]
    %v710 = vld [vmem:[#allocation5 + $0x1440] sm:$0xff]
    %v711 = vld [vmem:[#allocation5 + $0x1448] sm:$0xff]
    %v712 = vld [vmem:[#allocation5 + $0x1450] sm:$0xff]
    %v713 = vld [vmem:[#allocation5 + $0x1458] sm:$0xff]
    %v714 = vld [vmem:[#allocation5 + $0x1460] sm:$0xff]
    %v715 = vld [vmem:[#allocation5 + $0x1468] sm:$0xff]
    %v716 = vld [vmem:[#allocation5 + $0x1470] sm:$0xff]
    %v717 = vld [vmem:[#allocation5 + $0x1478] sm:$0xff]
    %v718 = vld [vmem:[#allocation5 + $0x1480] sm:$0xff]
    %v719 = vld [vmem:[#allocation5 + $0x1488] sm:$0xff]
    %v720 = vld [vmem:[#allocation5 + $0x1490] sm:$0xff]
    %v721 = vld [vmem:[#allocation5 + $0x1498] sm:$0xff]
    %v722 = vld [vmem:[#allocation5 + $0x14a0] sm:$0xff]
    %v723 = vld [vmem:[#allocation5 + $0x14a8] sm:$0xff]
    %v724 = vld [vmem:[#allocation5 + $0x14b0] sm:$0xff]
    %v725 = vld [vmem:[#allocation5 + $0x14b8] sm:$0xff]
    %v726 = vld [vmem:[#allocation5 + $0x14c0] sm:$0xff]
    %v727 = vld [vmem:[#allocation5 + $0x14c8] sm:$0xff]
    %v728 = vld [vmem:[#allocation5 + $0x14d0] sm:$0xff]
    %v729 = vld [vmem:[#allocation5 + $0x14d8] sm:$0xff]
    %v730 = vld [vmem:[#allocation5 + $0x14e0] sm:$0xff]
    %v731 = vld [vmem:[#allocation5 + $0x14e8] sm:$0xff]
    %v732 = vld [vmem:[#allocation5 + $0x14f0] sm:$0xff]
    %v733 = vld [vmem:[#allocation5 + $0x14f8] sm:$0xff]
    %v734 = vld [vmem:[#allocation5 + $0x1500] sm:$0xff]
    %v735 = vld [vmem:[#allocation5 + $0x1508] sm:$0xff]
    %v736 = vld [vmem:[#allocation5 + $0x1510] sm:$0xff]
    %v737 = vld [vmem:[#allocation5 + $0x1518] sm:$0xff]
    %v738 = vld [vmem:[#allocation5 + $0x1520] sm:$0xff]
    %v739 = vld [vmem:[#allocation5 + $0x1528] sm:$0xff]
    %v740 = vld [vmem:[#allocation5 + $0x1530] sm:$0xff]
    %v741 = vld [vmem:[#allocation5 + $0x1538] sm:$0xff]
    %v742 = vld [vmem:[#allocation5 + $0x1540] sm:$0xff]
    %v743 = vld [vmem:[#allocation5 + $0x1548] sm:$0xff]
    %v744 = vld [vmem:[#allocation5 + $0x1550] sm:$0xff]
    %v745 = vld [vmem:[#allocation5 + $0x1558] sm:$0xff]
    %v746 = vld [vmem:[#allocation5 + $0x1560] sm:$0xff]
    %v747 = vld [vmem:[#allocation5 + $0x1568] sm:$0xff]
    %v748 = vld [vmem:[#allocation5 + $0x1570] sm:$0xff]
    %v749 = vld [vmem:[#allocation5 + $0x1578] sm:$0xff]
    %v750 = vld [vmem:[#allocation5 + $0x1580] sm:$0xff]
    %v751 = vld [vmem:[#allocation5 + $0x1588] sm:$0xff]
    %v752 = vld [vmem:[#allocation5 + $0x1590] sm:$0xff]
    %v753 = vld [vmem:[#allocation5 + $0x1598] sm:$0xff]
    %v754 = vld [vmem:[#allocation5 + $0x15a0] sm:$0xff]
    %v755 = vld [vmem:[#allocation5 + $0x15a8] sm:$0xff]
    %v756 = vld [vmem:[#allocation5 + $0x15b0] sm:$0xff]
    %v757 = vld [vmem:[#allocation5 + $0x15b8] sm:$0xff]
    %v758 = vld [vmem:[#allocation5 + $0x15c0] sm:$0xff]
    %v759 = vld [vmem:[#allocation5 + $0x15c8] sm:$0xff]
    %v760 = vld [vmem:[#allocation5 + $0x15d0] sm:$0xff]
    %v761 = vld [vmem:[#allocation5 + $0x15d8] sm:$0xff]
    %v762 = vld [vmem:[#allocation5 + $0x15e0] sm:$0xff]
    %v763 = vld [vmem:[#allocation5 + $0x15e8] sm:$0xff]
    %v764 = vld [vmem:[#allocation5 + $0x15f0] sm:$0xff]
    %v765 = vld [vmem:[#allocation5 + $0x15f8] sm:$0xff]
    %v766 = vld [vmem:[#allocation5 + $0x1600] sm:$0xff]
    %v767 = vld [vmem:[#allocation5 + $0x1608] sm:$0xff]
    %v768 = vld [vmem:[#allocation5 + $0x1610] sm:$0xff]
    %v769 = vld [vmem:[#allocation5 + $0x1618] sm:$0xff]
    %v770 = vld [vmem:[#allocation5 + $0x1620] sm:$0xff]
    %v771 = vld [vmem:[#allocation5 + $0x1628] sm:$0xff]
    %v772 = vld [vmem:[#allocation5 + $0x1630] sm:$0xff]
    %v773 = vld [vmem:[#allocation5 + $0x1638] sm:$0xff]
    %v774 = vld [vmem:[#allocation5 + $0x1640] sm:$0xff]
    %v775 = vld [vmem:[#allocation5 + $0x1648] sm:$0xff]
    %v776 = vld [vmem:[#allocation5 + $0x1650] sm:$0xff]
    %v777 = vld [vmem:[#allocation5 + $0x1658] sm:$0xff]
    %v778 = vld [vmem:[#allocation5 + $0x1660] sm:$0xff]
    %v779 = vld [vmem:[#allocation5 + $0x1668] sm:$0xff]
    %v780 = vld [vmem:[#allocation5 + $0x1670] sm:$0xff]
    %v781 = vld [vmem:[#allocation5 + $0x1678] sm:$0xff]
    %v782 = vld [vmem:[#allocation5 + $0x1680] sm:$0xff]
    %v783 = vld [vmem:[#allocation5 + $0x1688] sm:$0xff]
    %v784 = vld [vmem:[#allocation5 + $0x1690] sm:$0xff]
    %v785 = vld [vmem:[#allocation5 + $0x1698] sm:$0xff]
    %v786 = vld [vmem:[#allocation5 + $0x16a0] sm:$0xff]
    %v787 = vld [vmem:[#allocation5 + $0x16a8] sm:$0xff]
    %v788 = vld [vmem:[#allocation5 + $0x16b0] sm:$0xff]
    %v789 = vld [vmem:[#allocation5 + $0x16b8] sm:$0xff]
    %v790 = vld [vmem:[#allocation5 + $0x16c0] sm:$0xff]
    %v791 = vld [vmem:[#allocation5 + $0x16c8] sm:$0xff]
    %v792 = vld [vmem:[#allocation5 + $0x16d0] sm:$0xff]
    %v793 = vld [vmem:[#allocation5 + $0x16d8] sm:$0xff]
    %v794 = vld [vmem:[#allocation5 + $0x16e0] sm:$0xff]
    %v795 = vld [vmem:[#allocation5 + $0x16e8] sm:$0xff]
    %v796 = vld [vmem:[#allocation5 + $0x16f0] sm:$0xff]
    %v797 = vld [vmem:[#allocation5 + $0x16f8] sm:$0xff]
    %v798 = vld [vmem:[#allocation5 + $0x1700] sm:$0xff]
    %v799 = vld [vmem:[#allocation5 + $0x1708] sm:$0xff]
    %v800 = vld [vmem:[#allocation5 + $0x1710] sm:$0xff]
    %v801 = vld [vmem:[#allocation5 + $0x1718] sm:$0xff]
    %v802 = vld [vmem:[#allocation5 + $0x1720] sm:$0xff]
    %v803 = vld [vmem:[#allocation5 + $0x1728] sm:$0xff]
    %v804 = vld [vmem:[#allocation5 + $0x1730] sm:$0xff]
    %v805 = vld [vmem:[#allocation5 + $0x1738] sm:$0xff]
    %v806 = vld [vmem:[#allocation5 + $0x1740] sm:$0xff]
    %v807 = vld [vmem:[#allocation5 + $0x1748] sm:$0xff]
    %v808 = vld [vmem:[#allocation5 + $0x1750] sm:$0xff]
    %v809 = vld [vmem:[#allocation5 + $0x1758] sm:$0xff]
    %v810 = vld [vmem:[#allocation5 + $0x1760] sm:$0xff]
    %v811 = vld [vmem:[#allocation5 + $0x1768] sm:$0xff]
    %v812 = vld [vmem:[#allocation5 + $0x1770] sm:$0xff]
    %v813 = vld [vmem:[#allocation5 + $0x1778] sm:$0xff]
    %v814 = vld [vmem:[#allocation5 + $0x1780] sm:$0xff]
    %v815 = vld [vmem:[#allocation5 + $0x1788] sm:$0xff]
    %v816 = vld [vmem:[#allocation5 + $0x1790] sm:$0xff]
    %v817 = vld [vmem:[#allocation5 + $0x1798] sm:$0xff]
    %v818 = vld [vmem:[#allocation5 + $0x17a0] sm:$0xff]
    %v819 = vld [vmem:[#allocation5 + $0x17a8] sm:$0xff]
    %v820 = vld [vmem:[#allocation5 + $0x17b0] sm:$0xff]
    %v821 = vld [vmem:[#allocation5 + $0x17b8] sm:$0xff]
    %v822 = vld [vmem:[#allocation5 + $0x17c0] sm:$0xff]
    %v823 = vld [vmem:[#allocation5 + $0x17c8] sm:$0xff]
    %v824 = vld [vmem:[#allocation5 + $0x17d0] sm:$0xff]
    %v825 = vld [vmem:[#allocation5 + $0x17d8] sm:$0xff]
    %v826 = vld [vmem:[#allocation5 + $0x17e0] sm:$0xff]
    %v827 = vld [vmem:[#allocation5 + $0x17e8] sm:$0xff]
    %v828 = vld [vmem:[#allocation5 + $0x17f0] sm:$0xff]
    %v829 = vld [vmem:[#allocation5 + $0x17f8] sm:$0xff]
    %v830 = vld [vmem:[#allocation7] sm:$0xff]
    %v831 = vld [vmem:[#allocation7 + $0x8] sm:$0xf]
    %v834 = vlaneseq
    %v835 = vshrl.u32 %v834, 7
    %v836 = vsub.s32 0, %v835
    %v837 = vrot.slane %v830, %v836
    %v838 = vlaneseq
    %v839 = vshrl.u32 %v838, 7
    %v840 = vsub.s32 1, %v839
    %v841 = vrot.slane %v830, %v840
    %v842 = vlaneseq
    %v843 = vshrl.u32 %v842, 7
    %v844 = vsub.s32 2, %v843
    %v845 = vrot.slane %v830, %v844
    %v846 = vlaneseq
    %v847 = vshrl.u32 %v846, 7
    %v848 = vsub.s32 3, %v847
    %v849 = vrot.slane %v830, %v848
    %v850 = vlaneseq
    %v851 = vshrl.u32 %v850, 7
    %v852 = vsub.s32 4, %v851
    %v853 = vrot.slane %v830, %v852
    %v854 = vlaneseq
    %v855 = vshrl.u32 %v854, 7
    %v856 = vsub.s32 5, %v855
    %v857 = vrot.slane %v830, %v856
    %v858 = vlaneseq
    %v859 = vshrl.u32 %v858, 7
    %v860 = vsub.s32 6, %v859
    %v861 = vrot.slane %v830, %v860
    %v862 = vlaneseq
    %v863 = vshrl.u32 %v862, 7
    %v864 = vsub.s32 7, %v863
    %v865 = vrot.slane %v830, %v864
    %v866 = vlaneseq
    %v867 = vshrl.u32 %v866, 7
    %v868 = vsub.s32 0, %v867
    %v869 = vrot.slane %v831, %v868
    %v870 = vlaneseq
    %v871 = vshrl.u32 %v870, 7
    %v872 = vsub.s32 1, %v871
    %v873 = vrot.slane %v831, %v872
    %v874 = vlaneseq
    %v875 = vshrl.u32 %v874, 7
    %v876 = vsub.s32 2, %v875
    %v877 = vrot.slane %v831, %v876
    %v878 = vlaneseq
    %v879 = vshrl.u32 %v878, 7
    %v880 = vsub.s32 3, %v879
    %v881 = vrot.slane %v831, %v880
    %894 = vmatprep.subr.mxu0 %v63
    %895 = vmatpush1.xpose.msra.mxu0 %v62
    %896 = vmatprep.subr.mxu0 %v67
    %897 = vmatpush1.xpose.msra.mxu0 %v66
    %898 = vmatprep.subr.mxu0 %v71
    %899 = vmatpush1.xpose.msra.mxu0 %v70
    %900 = vmatprep.subr.mxu0 %v75
    %901 = vmatpush1.xpose.msra.mxu0 %v74
    %902 = vmatprep.subr.mxu0 %v79
    %903 = vmatpush1.xpose.msra.mxu0 %v78
    %904 = vmatprep.subr.mxu0 %v83
    %905 = vmatpush1.xpose.msra.mxu0 %v82
    %906 = vmatprep.subr.mxu0 %v87
    %907 = vmatpush1.xpose.msra.mxu0 %v86
    %908 = vmatprep.subr.mxu0 %v91
    %909 = vmatpush1.xpose.msra.mxu0 %v90
    %910 = vmatprep.subr.mxu0 %v95
    %911 = vmatpush1.xpose.msra.mxu0 %v94
    %912 = vmatprep.subr.mxu0 %v99
    %913 = vmatpush1.xpose.msra.mxu0 %v98
    %914 = vmatprep.subr.mxu0 %v103
    %915 = vmatpush1.xpose.msra.mxu0 %v102
    %916 = vmatprep.subr.mxu0 %v107
    %917 = vmatpush1.xpose.msra.mxu0 %v106
    %918 = vmatprep.subr.mxu0 %v111
    %919 = vmatpush1.xpose.msra.mxu0 %v110
    %920 = vmatprep.subr.mxu0 %v115
    %921 = vmatpush1.xpose.msra.mxu0 %v114
    %922 = vmatprep.subr.mxu0 %v119
    %923 = vmatpush1.xpose.msra.mxu0 %v118
    %924 = vmatprep.subr.mxu0 %v123
    %925 = vmatpush1.xpose.msra.mxu0 %v122
    %926 = vmatprep.subr.mxu0 %v127
    %927 = vmatpush1.xpose.msra.mxu0 %v126
    %928 = vmatprep.subr.mxu0 %v131
    %929 = vmatpush1.xpose.msra.mxu0 %v130
    %930 = vmatprep.subr.mxu0 %v135
    %931 = vmatpush1.xpose.msra.mxu0 %v134
    %932 = vmatprep.subr.mxu0 %v139
    %933 = vmatpush1.xpose.msra.mxu0 %v138
    %934 = vmatprep.subr.mxu0 %v143
    %935 = vmatpush1.xpose.msra.mxu0 %v142
    %936 = vmatprep.subr.mxu0 %v147
    %937 = vmatpush1.xpose.msra.mxu0 %v146
    %938 = vmatprep.subr.mxu0 %v151
    %939 = vmatpush1.xpose.msra.mxu0 %v150
    %940 = vmatprep.subr.mxu0 %v155
    %941 = vmatpush1.xpose.msra.mxu0 %v154
    %942 = vmatprep.subr.mxu0 %v159
    %943 = vmatpush1.xpose.msra.mxu0 %v158
    %944 = vmatprep.subr.mxu0 %v163
    %945 = vmatpush1.xpose.msra.mxu0 %v162
    %946 = vmatprep.subr.mxu0 %v167
    %947 = vmatpush1.xpose.msra.mxu0 %v166
    %948 = vmatprep.subr.mxu0 %v171
    %949 = vmatpush1.xpose.msra.mxu0 %v170
    %950 = vmatprep.subr.mxu0 %v175
    %951 = vmatpush1.xpose.msra.mxu0 %v174
    %952 = vmatprep.subr.mxu0 %v179
    %953 = vmatpush1.xpose.msra.mxu0 %v178
    %954 = vmatprep.subr.mxu0 %v183
    %955 = vmatpush1.xpose.msra.mxu0 %v182
    %956 = vmatprep.subr.mxu0 %v187
    %957 = vmatpush1.xpose.msra.mxu0 %v186
    %958 = vmatprep.mubr.f32.mxu0 %v55
    %959 = vmatmul.mubr.f32.gmra.mrb[0].mxu0 %v54
    %v960 = vpop.f32.mrb[0].mxu0
    %v961 = vadd.f32 %v837, %v960
    %v962 = vpop.f32.mrb[0].mxu0
    %v963 = vadd.f32 %v841, %v962
    %964 = vmatprep.mubr.f32.mxu0 %v59
    %965 = vmatmul.mubr.f32.gmra.mrb[0].mxu0 %v58
    %v966 = vpop.f32.mrb[0].mxu0
    %v967 = vadd.f32 %v837, %v966
    %v968 = vpop.f32.mrb[0].mxu0
    %v969 = vadd.f32 %v841, %v968
    %970 = vdwg.mxu0
    %971 = vmatprep.subr.mxu0 %v65
    %972 = vmatpush1.xpose.msra.mxu0 %v64
    %973 = vmatprep.subr.mxu0 %v69
    %974 = vmatpush1.xpose.msra.mxu0 %v68
    %975 = vmatprep.subr.mxu0 %v73
    %976 = vmatpush1.xpose.msra.mxu0 %v72
    %977 = vmatprep.subr.mxu0 %v77
    %978 = vmatpush1.xpose.msra.mxu0 %v76
    %979 = vmatprep.subr.mxu0 %v81
    %980 = vmatpush1.xpose.msra.mxu0 %v80
    %981 = vmatprep.subr.mxu0 %v85
    %982 = vmatpush1.xpose.msra.mxu0 %v84
    %983 = vmatprep.subr.mxu0 %v89
    %984 = vmatpush1.xpose.msra.mxu0 %v88
    %985 = vmatprep.subr.mxu0 %v93
    %986 = vmatpush1.xpose.msra.mxu0 %v92
    %987 = vmatprep.subr.mxu0 %v97
    %988 = vmatpush1.xpose.msra.mxu0 %v96
    %989 = vmatprep.subr.mxu0 %v101
    %990 = vmatpush1.xpose.msra.mxu0 %v100
    %991 = vmatprep.subr.mxu0 %v105
    %992 = vmatpush1.xpose.msra.mxu0 %v104
    %993 = vmatprep.subr.mxu0 %v109
    %994 = vmatpush1.xpose.msra.mxu0 %v108
    %995 = vmatprep.subr.mxu0 %v113
    %996 = vmatpush1.xpose.msra.mxu0 %v112
    %997 = vmatprep.subr.mxu0 %v117
    %998 = vmatpush1.xpose.msra.mxu0 %v116
    %999 = vmatprep.subr.mxu0 %v121
    %1000 = vmatpush1.xpose.msra.mxu0 %v120
    %1001 = vmatprep.subr.mxu0 %v125
    %1002 = vmatpush1.xpose.msra.mxu0 %v124
    %1003 = vmatprep.subr.mxu0 %v129
    %1004 = vmatpush1.xpose.msra.mxu0 %v128
    %1005 = vmatprep.subr.mxu0 %v133
    %1006 = vmatpush1.xpose.msra.mxu0 %v132
    %1007 = vmatprep.subr.mxu0 %v137
    %1008 = vmatpush1.xpose.msra.mxu0 %v136
    %1009 = vmatprep.subr.mxu0 %v141
    %1010 = vmatpush1.xpose.msra.mxu0 %v140
    %1011 = vmatprep.subr.mxu0 %v145
    %1012 = vmatpush1.xpose.msra.mxu0 %v144
    %1013 = vmatprep.subr.mxu0 %v149
    %1014 = vmatpush1.xpose.msra.mxu0 %v148
    %1015 = vmatprep.subr.mxu0 %v153
    %1016 = vmatpush1.xpose.msra.mxu0 %v152
    %1017 = vmatprep.subr.mxu0 %v157
    %1018 = vmatpush1.xpose.msra.mxu0 %v156
    %1019 = vmatprep.subr.mxu0 %v161
    %1020 = vmatpush1.xpose.msra.mxu0 %v160
    %1021 = vmatprep.subr.mxu0 %v165
    %1022 = vmatpush1.xpose.msra.mxu0 %v164
    %1023 = vmatprep.subr.mxu0 %v169
    %1024 = vmatpush1.xpose.msra.mxu0 %v168
    %1025 = vmatprep.subr.mxu0 %v173
    %1026 = vmatpush1.xpose.msra.mxu0 %v172
    %1027 = vmatprep.subr.mxu0 %v177
    %1028 = vmatpush1.xpose.msra.mxu0 %v176
    %1029 = vmatprep.subr.mxu0 %v181
    %1030 = vmatpush1.xpose.msra.mxu0 %v180
    %1031 = vmatprep.subr.mxu0 %v185
    %1032 = vmatpush1.xpose.msra.mxu0 %v184
    %1033 = vmatprep.subr.mxu0 %v189
    %1034 = vmatpush1.xpose.msra.mxu0 %v188
    %1035 = vmatprep.mubr.f32.mxu0 %v57
    %1036 = vmatmul.mubr.f32.gmra.mrb[0].mxu0 %v56
    %v1037 = vpop.f32.mrb[0].mxu0
    %v1038 = vadd.f32 %v961, %v1037
    %v1039 = vpop.f32.mrb[0].mxu0
    %v1040 = vadd.f32 %v963, %v1039
    %1041 = vmatprep.mubr.f32.mxu0 %v61
    %1042 = vmatmul.mubr.f32.gmra.mrb[0].mxu0 %v60
    %v1043 = vpop.f32.mrb[0].mxu0
    %v1044 = vadd.f32 %v967, %v1043
    %v1045 = vpop.f32.mrb[0].mxu0
    %v1046 = vadd.f32 %v969, %v1045
    %1047 = vdwg.mxu0
    %1048 = vmatprep.subr.mxu0 %v191
    %1049 = vmatpush1.xpose.msra.mxu0 %v190
    %1050 = vmatprep.subr.mxu0 %v195
    %1051 = vmatpush1.xpose.msra.mxu0 %v194
    %1052 = vmatprep.subr.mxu0 %v199
    %1053 = vmatpush1.xpose.msra.mxu0 %v198
    %1054 = vmatprep.subr.mxu0 %v203
    %1055 = vmatpush1.xpose.msra.mxu0 %v202
    %1056 = vmatprep.subr.mxu0 %v207
    %1057 = vmatpush1.xpose.msra.mxu0 %v206
    %1058 = vmatprep.subr.mxu0 %v211
    %1059 = vmatpush1.xpose.msra.mxu0 %v210
    %1060 = vmatprep.subr.mxu0 %v215
    %1061 = vmatpush1.xpose.msra.mxu0 %v214
    %1062 = vmatprep.subr.mxu0 %v219
    %1063 = vmatpush1.xpose.msra.mxu0 %v218
    %1064 = vmatprep.subr.mxu0 %v223
    %1065 = vmatpush1.xpose.msra.mxu0 %v222
    %1066 = vmatprep.subr.mxu0 %v227
    %1067 = vmatpush1.xpose.msra.mxu0 %v226
    %1068 = vmatprep.subr.mxu0 %v231
    %1069 = vmatpush1.xpose.msra.mxu0 %v230
    %1070 = vmatprep.subr.mxu0 %v235
    %1071 = vmatpush1.xpose.msra.mxu0 %v234
    %1072 = vmatprep.subr.mxu0 %v239
    %1073 = vmatpush1.xpose.msra.mxu0 %v238
    %1074 = vmatprep.subr.mxu0 %v243
    %1075 = vmatpush1.xpose.msra.mxu0 %v242
    %1076 = vmatprep.subr.mxu0 %v247
    %1077 = vmatpush1.xpose.msra.mxu0 %v246
    %1078 = vmatprep.subr.mxu0 %v251
    %1079 = vmatpush1.xpose.msra.mxu0 %v250
    %1080 = vmatprep.subr.mxu0 %v255
    %1081 = vmatpush1.xpose.msra.mxu0 %v254
    %1082 = vmatprep.subr.mxu0 %v259
    %1083 = vmatpush1.xpose.msra.mxu0 %v258
    %1084 = vmatprep.subr.mxu0 %v263
    %1085 = vmatpush1.xpose.msra.mxu0 %v262
    %1086 = vmatprep.subr.mxu0 %v267
    %1087 = vmatpush1.xpose.msra.mxu0 %v266
    %1088 = vmatprep.subr.mxu0 %v271
    %1089 = vmatpush1.xpose.msra.mxu0 %v270
    %1090 = vmatprep.subr.mxu0 %v275
    %1091 = vmatpush1.xpose.msra.mxu0 %v274
    %1092 = vmatprep.subr.mxu0 %v279
    %1093 = vmatpush1.xpose.msra.mxu0 %v278
    %1094 = vmatprep.subr.mxu0 %v283
    %1095 = vmatpush1.xpose.msra.mxu0 %v282
    %1096 = vmatprep.subr.mxu0 %v287
    %1097 = vmatpush1.xpose.msra.mxu0 %v286
    %1098 = vmatprep.subr.mxu0 %v291
    %1099 = vmatpush1.xpose.msra.mxu0 %v290
    %1100 = vmatprep.subr.mxu0 %v295
    %1101 = vmatpush1.xpose.msra.mxu0 %v294
    %1102 = vmatprep.subr.mxu0 %v299
    %1103 = vmatpush1.xpose.msra.mxu0 %v298
    %1104 = vmatprep.subr.mxu0 %v303
    %1105 = vmatpush1.xpose.msra.mxu0 %v302
    %1106 = vmatprep.subr.mxu0 %v307
    %1107 = vmatpush1.xpose.msra.mxu0 %v306
    %1108 = vmatprep.subr.mxu0 %v311
    %1109 = vmatpush1.xpose.msra.mxu0 %v310
    %1110 = vmatprep.subr.mxu0 %v315
    %1111 = vmatpush1.xpose.msra.mxu0 %v314
    %1112 = vmatprep.mubr.f32.mxu0 %v55
    %1113 = vmatmul.mubr.f32.gmra.mrb[0].mxu0 %v54
    %v1114 = vpop.f32.mrb[0].mxu0
    %v1115 = vadd.f32 %v845, %v1114
    %v1116 = vpop.f32.mrb[0].mxu0
    %v1117 = vadd.f32 %v849, %v1116
    %1118 = vmatprep.mubr.f32.mxu0 %v59
    %1119 = vmatmul.mubr.f32.gmra.mrb[0].mxu0 %v58
    %v1120 = vpop.f32.mrb[0].mxu0
    %v1121 = vadd.f32 %v845, %v1120
    %v1122 = vpop.f32.mrb[0].mxu0
    %v1123 = vadd.f32 %v849, %v1122
    %1124 = vdwg.mxu0
    %1125 = vmatprep.subr.mxu0 %v193
    %1126 = vmatpush1.xpose.msra.mxu0 %v192
    %1127 = vmatprep.subr.mxu0 %v197
    %1128 = vmatpush1.xpose.msra.mxu0 %v196
    %1129 = vmatprep.subr.mxu0 %v201
    %1130 = vmatpush1.xpose.msra.mxu0 %v200
    %1131 = vmatprep.subr.mxu0 %v205
    %1132 = vmatpush1.xpose.msra.mxu0 %v204
    %1133 = vmatprep.subr.mxu0 %v209
    %1134 = vmatpush1.xpose.msra.mxu0 %v208
    %1135 = vmatprep.subr.mxu0 %v213
    %1136 = vmatpush1.xpose.msra.mxu0 %v212
    %1137 = vmatprep.subr.mxu0 %v217
    %1138 = vmatpush1.xpose.msra.mxu0 %v216
    %1139 = vmatprep.subr.mxu0 %v221
    %1140 = vmatpush1.xpose.msra.mxu0 %v220
    %1141 = vmatprep.subr.mxu0 %v225
    %1142 = vmatpush1.xpose.msra.mxu0 %v224
    %1143 = vmatprep.subr.mxu0 %v229
    %1144 = vmatpush1.xpose.msra.mxu0 %v228
    %1145 = vmatprep.subr.mxu0 %v233
    %1146 = vmatpush1.xpose.msra.mxu0 %v232
    %1147 = vmatprep.subr.mxu0 %v237
    %1148 = vmatpush1.xpose.msra.mxu0 %v236
    %1149 = vmatprep.subr.mxu0 %v241
    %1150 = vmatpush1.xpose.msra.mxu0 %v240
    %1151 = vmatprep.subr.mxu0 %v245
    %1152 = vmatpush1.xpose.msra.mxu0 %v244
    %1153 = vmatprep.subr.mxu0 %v249
    %1154 = vmatpush1.xpose.msra.mxu0 %v248
    %1155 = vmatprep.subr.mxu0 %v253
    %1156 = vmatpush1.xpose.msra.mxu0 %v252
    %1157 = vmatprep.subr.mxu0 %v257
    %1158 = vmatpush1.xpose.msra.mxu0 %v256
    %1159 = vmatprep.subr.mxu0 %v261
    %1160 = vmatpush1.xpose.msra.mxu0 %v260
    %1161 = vmatprep.subr.mxu0 %v265
    %1162 = vmatpush1.xpose.msra.mxu0 %v264
    %1163 = vmatprep.subr.mxu0 %v269
    %1164 = vmatpush1.xpose.msra.mxu0 %v268
    %1165 = vmatprep.subr.mxu0 %v273
    %1166 = vmatpush1.xpose.msra.mxu0 %v272
    %1167 = vmatprep.subr.mxu0 %v277
    %1168 = vmatpush1.xpose.msra.mxu0 %v276
    %1169 = vmatprep.subr.mxu0 %v281
    %1170 = vmatpush1.xpose.msra.mxu0 %v280
    %1171 = vmatprep.subr.mxu0 %v285
    %1172 = vmatpush1.xpose.msra.mxu0 %v284
    %1173 = vmatprep.subr.mxu0 %v289
    %1174 = vmatpush1.xpose.msra.mxu0 %v288
    %1175 = vmatprep.subr.mxu0 %v293
    %1176 = vmatpush1.xpose.msra.mxu0 %v292
    %1177 = vmatprep.subr.mxu0 %v297
    %1178 = vmatpush1.xpose.msra.mxu0 %v296
    %1179 = vmatprep.subr.mxu0 %v301
    %1180 = vmatpush1.xpose.msra.mxu0 %v300
    %1181 = vmatprep.subr.mxu0 %v305
    %1182 = vmatpush1.xpose.msra.mxu0 %v304
    %1183 = vmatprep.subr.mxu0 %v309
    %1184 = vmatpush1.xpose.msra.mxu0 %v308
    %1185 = vmatprep.subr.mxu0 %v313
    %1186 = vmatpush1.xpose.msra.mxu0 %v312
    %1187 = vmatprep.subr.mxu0 %v317
    %1188 = vmatpush1.xpose.msra.mxu0 %v316
    %1189 = vmatprep.mubr.f32.mxu0 %v57
    %1190 = vmatmul.mubr.f32.gmra.mrb[0].mxu0 %v56
    %v1191 = vpop.f32.mrb[0].mxu0
    %v1192 = vadd.f32 %v1115, %v1191
    %v1193 = vpop.f32.mrb[0].mxu0
    %v1194 = vadd.f32 %v1117, %v1193
    %1195 = vmatprep.mubr.f32.mxu0 %v61
    %1196 = vmatmul.mubr.f32.gmra.mrb[0].mxu0 %v60
    %v1197 = vpop.f32.mrb[0].mxu0
    %v1198 = vadd.f32 %v1121, %v1197
    %v1199 = vpop.f32.mrb[0].mxu0
    %v1200 = vadd.f32 %v1123, %v1199
    %1201 = vdwg.mxu0
    %1202 = vmatprep.subr.mxu0 %v319
    %1203 = vmatpush1.xpose.msra.mxu0 %v318
    %1204 = vmatprep.subr.mxu0 %v323
    %1205 = vmatpush1.xpose.msra.mxu0 %v322
    %1206 = vmatprep.subr.mxu0 %v327
    %1207 = vmatpush1.xpose.msra.mxu0 %v326
    %1208 = vmatprep.subr.mxu0 %v331
    %1209 = vmatpush1.xpose.msra.mxu0 %v330
    %1210 = vmatprep.subr.mxu0 %v335
    %1211 = vmatpush1.xpose.msra.mxu0 %v334
    %1212 = vmatprep.subr.mxu0 %v339
    %1213 = vmatpush1.xpose.msra.mxu0 %v338
    %1214 = vmatprep.subr.mxu0 %v343
    %1215 = vmatpush1.xpose.msra.mxu0 %v342
    %1216 = vmatprep.subr.mxu0 %v347
    %1217 = vmatpush1.xpose.msra.mxu0 %v346
    %1218 = vmatprep.subr.mxu0 %v351
    %1219 = vmatpush1.xpose.msra.mxu0 %v350
    %1220 = vmatprep.subr.mxu0 %v355
    %1221 = vmatpush1.xpose.msra.mxu0 %v354
    %1222 = vmatprep.subr.mxu0 %v359
    %1223 = vmatpush1.xpose.msra.mxu0 %v358
    %1224 = vmatprep.subr.mxu0 %v363
    %1225 = vmatpush1.xpose.msra.mxu0 %v362
    %1226 = vmatprep.subr.mxu0 %v367
    %1227 = vmatpush1.xpose.msra.mxu0 %v366
    %1228 = vmatprep.subr.mxu0 %v371
    %1229 = vmatpush1.xpose.msra.mxu0 %v370
    %1230 = vmatprep.subr.mxu0 %v375
    %1231 = vmatpush1.xpose.msra.mxu0 %v374
    %1232 = vmatprep.subr.mxu0 %v379
    %1233 = vmatpush1.xpose.msra.mxu0 %v378
    %1234 = vmatprep.subr.mxu0 %v383
    %1235 = vmatpush1.xpose.msra.mxu0 %v382
    %1236 = vmatprep.subr.mxu0 %v387
    %1237 = vmatpush1.xpose.msra.mxu0 %v386
    %1238 = vmatprep.subr.mxu0 %v391
    %1239 = vmatpush1.xpose.msra.mxu0 %v390
    %1240 = vmatprep.subr.mxu0 %v395
    %1241 = vmatpush1.xpose.msra.mxu0 %v394
    %1242 = vmatprep.subr.mxu0 %v399
    %1243 = vmatpush1.xpose.msra.mxu0 %v398
    %1244 = vmatprep.subr.mxu0 %v403
    %1245 = vmatpush1.xpose.msra.mxu0 %v402
    %1246 = vmatprep.subr.mxu0 %v407
    %1247 = vmatpush1.xpose.msra.mxu0 %v406
    %1248 = vmatprep.subr.mxu0 %v411
    %1249 = vmatpush1.xpose.msra.mxu0 %v410
    %1250 = vmatprep.subr.mxu0 %v415
    %1251 = vmatpush1.xpose.msra.mxu0 %v414
    %1252 = vmatprep.subr.mxu0 %v419
    %1253 = vmatpush1.xpose.msra.mxu0 %v418
    %1254 = vmatprep.subr.mxu0 %v423
    %1255 = vmatpush1.xpose.msra.mxu0 %v422
    %1256 = vmatprep.subr.mxu0 %v427
    %1257 = vmatpush1.xpose.msra.mxu0 %v426
    %1258 = vmatprep.subr.mxu0 %v431
    %1259 = vmatpush1.xpose.msra.mxu0 %v430
    %1260 = vmatprep.subr.mxu0 %v435
    %1261 = vmatpush1.xpose.msra.mxu0 %v434
    %1262 = vmatprep.subr.mxu0 %v439
    %1263 = vmatpush1.xpose.msra.mxu0 %v438
    %1264 = vmatprep.subr.mxu0 %v443
    %1265 = vmatpush1.xpose.msra.mxu0 %v442
    %1266 = vmatprep.mubr.f32.mxu0 %v55
    %1267 = vmatmul.mubr.f32.gmra.mrb[0].mxu0 %v54
    %v1268 = vpop.f32.mrb[0].mxu0
    %v1269 = vadd.f32 %v853, %v1268
    %v1270 = vpop.f32.mrb[0].mxu0
    %v1271 = vadd.f32 %v857, %v1270
    %1272 = vmatprep.mubr.f32.mxu0 %v59
    %1273 = vmatmul.mubr.f32.gmra.mrb[0].mxu0 %v58
    %v1274 = vpop.f32.mrb[0].mxu0
    %v1275 = vadd.f32 %v853, %v1274
    %v1276 = vpop.f32.mrb[0].mxu0
    %v1277 = vadd.f32 %v857, %v1276
    %1278 = vdwg.mxu0
    %1279 = vmatprep.subr.mxu0 %v321
    %1280 = vmatpush1.xpose.msra.mxu0 %v320
    %1281 = vmatprep.subr.mxu0 %v325
    %1282 = vmatpush1.xpose.msra.mxu0 %v324
    %1283 = vmatprep.subr.mxu0 %v329
    %1284 = vmatpush1.xpose.msra.mxu0 %v328
    %1285 = vmatprep.subr.mxu0 %v333
    %1286 = vmatpush1.xpose.msra.mxu0 %v332
    %1287 = vmatprep.subr.mxu0 %v337
    %1288 = vmatpush1.xpose.msra.mxu0 %v336
    %1289 = vmatprep.subr.mxu0 %v341
    %1290 = vmatpush1.xpose.msra.mxu0 %v340
    %1291 = vmatprep.subr.mxu0 %v345
    %1292 = vmatpush1.xpose.msra.mxu0 %v344
    %1293 = vmatprep.subr.mxu0 %v349
    %1294 = vmatpush1.xpose.msra.mxu0 %v348
    %1295 = vmatprep.subr.mxu0 %v353
    %1296 = vmatpush1.xpose.msra.mxu0 %v352
    %1297 = vmatprep.subr.mxu0 %v357
    %1298 = vmatpush1.xpose.msra.mxu0 %v356
    %1299 = vmatprep.subr.mxu0 %v361
    %1300 = vmatpush1.xpose.msra.mxu0 %v360
    %1301 = vmatprep.subr.mxu0 %v365
    %1302 = vmatpush1.xpose.msra.mxu0 %v364
    %1303 = vmatprep.subr.mxu0 %v369
    %1304 = vmatpush1.xpose.msra.mxu0 %v368
    %1305 = vmatprep.subr.mxu0 %v373
    %1306 = vmatpush1.xpose.msra.mxu0 %v372
    %1307 = vmatprep.subr.mxu0 %v377
    %1308 = vmatpush1.xpose.msra.mxu0 %v376
    %1309 = vmatprep.subr.mxu0 %v381
    %1310 = vmatpush1.xpose.msra.mxu0 %v380
    %1311 = vmatprep.subr.mxu0 %v385
    %1312 = vmatpush1.xpose.msra.mxu0 %v384
    %1313 = vmatprep.subr.mxu0 %v389
    %1314 = vmatpush1.xpose.msra.mxu0 %v388
    %1315 = vmatprep.subr.mxu0 %v393
    %1316 = vmatpush1.xpose.msra.mxu0 %v392
    %1317 = vmatprep.subr.mxu0 %v397
    %1318 = vmatpush1.xpose.msra.mxu0 %v396
    %1319 = vmatprep.subr.mxu0 %v401
    %1320 = vmatpush1.xpose.msra.mxu0 %v400
    %1321 = vmatprep.subr.mxu0 %v405
    %1322 = vmatpush1.xpose.msra.mxu0 %v404
    %1323 = vmatprep.subr.mxu0 %v409
    %1324 = vmatpush1.xpose.msra.mxu0 %v408
    %1325 = vmatprep.subr.mxu0 %v413
    %1326 = vmatpush1.xpose.msra.mxu0 %v412
    %1327 = vmatprep.subr.mxu0 %v417
    %1328 = vmatpush1.xpose.msra.mxu0 %v416
    %1329 = vmatprep.subr.mxu0 %v421
    %1330 = vmatpush1.xpose.msra.mxu0 %v420
    %1331 = vmatprep.subr.mxu0 %v425
    %1332 = vmatpush1.xpose.msra.mxu0 %v424
    %1333 = vmatprep.subr.mxu0 %v429
    %1334 = vmatpush1.xpose.msra.mxu0 %v428
    %1335 = vmatprep.subr.mxu0 %v433
    %1336 = vmatpush1.xpose.msra.mxu0 %v432
    %1337 = vmatprep.subr.mxu0 %v437
    %1338 = vmatpush1.xpose.msra.mxu0 %v436
    %1339 = vmatprep.subr.mxu0 %v441
    %1340 = vmatpush1.xpose.msra.mxu0 %v440
    %1341 = vmatprep.subr.mxu0 %v445
    %1342 = vmatpush1.xpose.msra.mxu0 %v444
    %1343 = vmatprep.mubr.f32.mxu0 %v57
    %1344 = vmatmul.mubr.f32.gmra.mrb[0].mxu0 %v56
    %v1345 = vpop.f32.mrb[0].mxu0
    %v1346 = vadd.f32 %v1269, %v1345
    %v1347 = vpop.f32.mrb[0].mxu0
    %v1348 = vadd.f32 %v1271, %v1347
    %1349 = vmatprep.mubr.f32.mxu0 %v61
    %1350 = vmatmul.mubr.f32.gmra.mrb[0].mxu0 %v60
    %v1351 = vpop.f32.mrb[0].mxu0
    %v1352 = vadd.f32 %v1275, %v1351
    %v1353 = vpop.f32.mrb[0].mxu0
    %v1354 = vadd.f32 %v1277, %v1353
    %1355 = vdwg.mxu0
    %1356 = vmatprep.subr.mxu0 %v447
    %1357 = vmatpush1.xpose.msra.mxu0 %v446
    %1358 = vmatprep.subr.mxu0 %v451
    %1359 = vmatpush1.xpose.msra.mxu0 %v450
    %1360 = vmatprep.subr.mxu0 %v455
    %1361 = vmatpush1.xpose.msra.mxu0 %v454
    %1362 = vmatprep.subr.mxu0 %v459
    %1363 = vmatpush1.xpose.msra.mxu0 %v458
    %1364 = vmatprep.subr.mxu0 %v463
    %1365 = vmatpush1.xpose.msra.mxu0 %v462
    %1366 = vmatprep.subr.mxu0 %v467
    %1367 = vmatpush1.xpose.msra.mxu0 %v466
    %1368 = vmatprep.subr.mxu0 %v471
    %1369 = vmatpush1.xpose.msra.mxu0 %v470
    %1370 = vmatprep.subr.mxu0 %v475
    %1371 = vmatpush1.xpose.msra.mxu0 %v474
    %1372 = vmatprep.subr.mxu0 %v479
    %1373 = vmatpush1.xpose.msra.mxu0 %v478
    %1374 = vmatprep.subr.mxu0 %v483
    %1375 = vmatpush1.xpose.msra.mxu0 %v482
    %1376 = vmatprep.subr.mxu0 %v487
    %1377 = vmatpush1.xpose.msra.mxu0 %v486
    %1378 = vmatprep.subr.mxu0 %v491
    %1379 = vmatpush1.xpose.msra.mxu0 %v490
    %1380 = vmatprep.subr.mxu0 %v495
    %1381 = vmatpush1.xpose.msra.mxu0 %v494
    %1382 = vmatprep.subr.mxu0 %v499
    %1383 = vmatpush1.xpose.msra.mxu0 %v498
    %1384 = vmatprep.subr.mxu0 %v503
    %1385 = vmatpush1.xpose.msra.mxu0 %v502
    %1386 = vmatprep.subr.mxu0 %v507
    %1387 = vmatpush1.xpose.msra.mxu0 %v506
    %1388 = vmatprep.subr.mxu0 %v511
    %1389 = vmatpush1.xpose.msra.mxu0 %v510
    %1390 = vmatprep.subr.mxu0 %v515
    %1391 = vmatpush1.xpose.msra.mxu0 %v514
    %1392 = vmatprep.subr.mxu0 %v519
    %1393 = vmatpush1.xpose.msra.mxu0 %v518
    %1394 = vmatprep.subr.mxu0 %v523
    %1395 = vmatpush1.xpose.msra.mxu0 %v522
    %1396 = vmatprep.subr.mxu0 %v527
    %1397 = vmatpush1.xpose.msra.mxu0 %v526
    %1398 = vmatprep.subr.mxu0 %v531
    %1399 = vmatpush1.xpose.msra.mxu0 %v530
    %1400 = vmatprep.subr.mxu0 %v535
    %1401 = vmatpush1.xpose.msra.mxu0 %v534
    %1402 = vmatprep.subr.mxu0 %v539
    %1403 = vmatpush1.xpose.msra.mxu0 %v538
    %1404 = vmatprep.subr.mxu0 %v543
    %1405 = vmatpush1.xpose.msra.mxu0 %v542
    %1406 = vmatprep.subr.mxu0 %v547
    %1407 = vmatpush1.xpose.msra.mxu0 %v546
    %1408 = vmatprep.subr.mxu0 %v551
    %1409 = vmatpush1.xpose.msra.mxu0 %v550
    %1410 = vmatprep.subr.mxu0 %v555
    %1411 = vmatpush1.xpose.msra.mxu0 %v554
    %1412 = vmatprep.subr.mxu0 %v559
    %1413 = vmatpush1.xpose.msra.mxu0 %v558
    %1414 = vmatprep.subr.mxu0 %v563
    %1415 = vmatpush1.xpose.msra.mxu0 %v562
    %1416 = vmatprep.subr.mxu0 %v567
    %1417 = vmatpush1.xpose.msra.mxu0 %v566
    %1418 = vmatprep.subr.mxu0 %v571
    %1419 = vmatpush1.xpose.msra.mxu0 %v570
    %1420 = vmatprep.mubr.f32.mxu0 %v55
    %1421 = vmatmul.mubr.f32.gmra.mrb[0].mxu0 %v54
    %v1422 = vpop.f32.mrb[0].mxu0
    %v1423 = vadd.f32 %v861, %v1422
    %v1424 = vpop.f32.mrb[0].mxu0
    %v1425 = vadd.f32 %v865, %v1424
    %1426 = vmatprep.mubr.f32.mxu0 %v59
    %1427 = vmatmul.mubr.f32.gmra.mrb[0].mxu0 %v58
    %v1428 = vpop.f32.mrb[0].mxu0
    %v1429 = vadd.f32 %v861, %v1428
    %v1430 = vpop.f32.mrb[0].mxu0
    %v1431 = vadd.f32 %v865, %v1430
    %1432 = vdwg.mxu0
    %1433 = vmatprep.subr.mxu0 %v449
    %1434 = vmatpush1.xpose.msra.mxu0 %v448
    %1435 = vmatprep.subr.mxu0 %v453
    %1436 = vmatpush1.xpose.msra.mxu0 %v452
    %1437 = vmatprep.subr.mxu0 %v457
    %1438 = vmatpush1.xpose.msra.mxu0 %v456
    %1439 = vmatprep.subr.mxu0 %v461
    %1440 = vmatpush1.xpose.msra.mxu0 %v460
    %1441 = vmatprep.subr.mxu0 %v465
    %1442 = vmatpush1.xpose.msra.mxu0 %v464
    %1443 = vmatprep.subr.mxu0 %v469
    %1444 = vmatpush1.xpose.msra.mxu0 %v468
    %1445 = vmatprep.subr.mxu0 %v473
    %1446 = vmatpush1.xpose.msra.mxu0 %v472
    %1447 = vmatprep.subr.mxu0 %v477
    %1448 = vmatpush1.xpose.msra.mxu0 %v476
    %1449 = vmatprep.subr.mxu0 %v481
    %1450 = vmatpush1.xpose.msra.mxu0 %v480
    %1451 = vmatprep.subr.mxu0 %v485
    %1452 = vmatpush1.xpose.msra.mxu0 %v484
    %1453 = vmatprep.subr.mxu0 %v489
    %1454 = vmatpush1.xpose.msra.mxu0 %v488
    %1455 = vmatprep.subr.mxu0 %v493
    %1456 = vmatpush1.xpose.msra.mxu0 %v492
    %1457 = vmatprep.subr.mxu0 %v497
    %1458 = vmatpush1.xpose.msra.mxu0 %v496
    %1459 = vmatprep.subr.mxu0 %v501
    %1460 = vmatpush1.xpose.msra.mxu0 %v500
    %1461 = vmatprep.subr.mxu0 %v505
    %1462 = vmatpush1.xpose.msra.mxu0 %v504
    %1463 = vmatprep.subr.mxu0 %v509
    %1464 = vmatpush1.xpose.msra.mxu0 %v508
    %1465 = vmatprep.subr.mxu0 %v513
    %1466 = vmatpush1.xpose.msra.mxu0 %v512
    %1467 = vmatprep.subr.mxu0 %v517
    %1468 = vmatpush1.xpose.msra.mxu0 %v516
    %1469 = vmatprep.subr.mxu0 %v521
    %1470 = vmatpush1.xpose.msra.mxu0 %v520
    %1471 = vmatprep.subr.mxu0 %v525
    %1472 = vmatpush1.xpose.msra.mxu0 %v524
    %1473 = vmatprep.subr.mxu0 %v529
    %1474 = vmatpush1.xpose.msra.mxu0 %v528
    %1475 = vmatprep.subr.mxu0 %v533
    %1476 = vmatpush1.xpose.msra.mxu0 %v532
    %1477 = vmatprep.subr.mxu0 %v537
    %1478 = vmatpush1.xpose.msra.mxu0 %v536
    %1479 = vmatprep.subr.mxu0 %v541
    %1480 = vmatpush1.xpose.msra.mxu0 %v540
    %1481 = vmatprep.subr.mxu0 %v545
    %1482 = vmatpush1.xpose.msra.mxu0 %v544
    %1483 = vmatprep.subr.mxu0 %v549
    %1484 = vmatpush1.xpose.msra.mxu0 %v548
    %1485 = vmatprep.subr.mxu0 %v553
    %1486 = vmatpush1.xpose.msra.mxu0 %v552
    %1487 = vmatprep.subr.mxu0 %v557
    %1488 = vmatpush1.xpose.msra.mxu0 %v556
    %1489 = vmatprep.subr.mxu0 %v561
    %1490 = vmatpush1.xpose.msra.mxu0 %v560
    %1491 = vmatprep.subr.mxu0 %v565
    %1492 = vmatpush1.xpose.msra.mxu0 %v564
    %1493 = vmatprep.subr.mxu0 %v569
    %1494 = vmatpush1.xpose.msra.mxu0 %v568
    %1495 = vmatprep.subr.mxu0 %v573
    %1496 = vmatpush1.xpose.msra.mxu0 %v572
    %1497 = vmatprep.mubr.f32.mxu0 %v57
    %1498 = vmatmul.mubr.f32.gmra.mrb[0].mxu0 %v56
    %v1499 = vpop.f32.mrb[0].mxu0
    %v1500 = vadd.f32 %v1423, %v1499
    %v1501 = vpop.f32.mrb[0].mxu0
    %v1502 = vadd.f32 %v1425, %v1501
    %1503 = vmatprep.mubr.f32.mxu0 %v61
    %1504 = vmatmul.mubr.f32.gmra.mrb[0].mxu0 %v60
    %v1505 = vpop.f32.mrb[0].mxu0
    %v1506 = vadd.f32 %v1429, %v1505
    %v1507 = vpop.f32.mrb[0].mxu0
    %v1508 = vadd.f32 %v1431, %v1507
    %1509 = vdwg.mxu0
    %1510 = vmatprep.subr.mxu0 %v575
    %1511 = vmatpush1.xpose.msra.mxu0 %v574
    %1512 = vmatprep.subr.mxu0 %v579
    %1513 = vmatpush1.xpose.msra.mxu0 %v578
    %1514 = vmatprep.subr.mxu0 %v583
    %1515 = vmatpush1.xpose.msra.mxu0 %v582
    %1516 = vmatprep.subr.mxu0 %v587
    %1517 = vmatpush1.xpose.msra.mxu0 %v586
    %1518 = vmatprep.subr.mxu0 %v591
    %1519 = vmatpush1.xpose.msra.mxu0 %v590
    %1520 = vmatprep.subr.mxu0 %v595
    %1521 = vmatpush1.xpose.msra.mxu0 %v594
    %1522 = vmatprep.subr.mxu0 %v599
    %1523 = vmatpush1.xpose.msra.mxu0 %v598
    %1524 = vmatprep.subr.mxu0 %v603
    %1525 = vmatpush1.xpose.msra.mxu0 %v602
    %1526 = vmatprep.subr.mxu0 %v607
    %1527 = vmatpush1.xpose.msra.mxu0 %v606
    %1528 = vmatprep.subr.mxu0 %v611
    %1529 = vmatpush1.xpose.msra.mxu0 %v610
    %1530 = vmatprep.subr.mxu0 %v615
    %1531 = vmatpush1.xpose.msra.mxu0 %v614
    %1532 = vmatprep.subr.mxu0 %v619
    %1533 = vmatpush1.xpose.msra.mxu0 %v618
    %1534 = vmatprep.subr.mxu0 %v623
    %1535 = vmatpush1.xpose.msra.mxu0 %v622
    %1536 = vmatprep.subr.mxu0 %v627
    %1537 = vmatpush1.xpose.msra.mxu0 %v626
    %1538 = vmatprep.subr.mxu0 %v631
    %1539 = vmatpush1.xpose.msra.mxu0 %v630
    %1540 = vmatprep.subr.mxu0 %v635
    %1541 = vmatpush1.xpose.msra.mxu0 %v634
    %1542 = vmatprep.subr.mxu0 %v639
    %1543 = vmatpush1.xpose.msra.mxu0 %v638
    %1544 = vmatprep.subr.mxu0 %v643
    %1545 = vmatpush1.xpose.msra.mxu0 %v642
    %1546 = vmatprep.subr.mxu0 %v647
    %1547 = vmatpush1.xpose.msra.mxu0 %v646
    %1548 = vmatprep.subr.mxu0 %v651
    %1549 = vmatpush1.xpose.msra.mxu0 %v650
    %1550 = vmatprep.subr.mxu0 %v655
    %1551 = vmatpush1.xpose.msra.mxu0 %v654
    %1552 = vmatprep.subr.mxu0 %v659
    %1553 = vmatpush1.xpose.msra.mxu0 %v658
    %1554 = vmatprep.subr.mxu0 %v663
    %1555 = vmatpush1.xpose.msra.mxu0 %v662
    %1556 = vmatprep.subr.mxu0 %v667
    %1557 = vmatpush1.xpose.msra.mxu0 %v666
    %1558 = vmatprep.subr.mxu0 %v671
    %1559 = vmatpush1.xpose.msra.mxu0 %v670
    %1560 = vmatprep.subr.mxu0 %v675
    %1561 = vmatpush1.xpose.msra.mxu0 %v674
    %1562 = vmatprep.subr.mxu0 %v679
    %1563 = vmatpush1.xpose.msra.mxu0 %v678
    %1564 = vmatprep.subr.mxu0 %v683
    %1565 = vmatpush1.xpose.msra.mxu0 %v682
    %1566 = vmatprep.subr.mxu0 %v687
    %1567 = vmatpush1.xpose.msra.mxu0 %v686
    %1568 = vmatprep.subr.mxu0 %v691
    %1569 = vmatpush1.xpose.msra.mxu0 %v690
    %1570 = vmatprep.subr.mxu0 %v695
    %1571 = vmatpush1.xpose.msra.mxu0 %v694
    %1572 = vmatprep.subr.mxu0 %v699
    %1573 = vmatpush1.xpose.msra.mxu0 %v698
    %1574 = vmatprep.mubr.f32.mxu0 %v55
    %1575 = vmatmul.mubr.f32.gmra.mrb[0].mxu0 %v54
    %v1576 = vpop.f32.mrb[0].mxu0
    %v1577 = vadd.f32 %v869, %v1576
    %v1578 = vpop.f32.mrb[0].mxu0
    %v1579 = vadd.f32 %v873, %v1578
    %1580 = vmatprep.mubr.f32.mxu0 %v59
    %1581 = vmatmul.mubr.f32.gmra.mrb[0].mxu0 %v58
    %v1582 = vpop.f32.mrb[0].mxu0
    %v1583 = vadd.f32 %v869, %v1582
    %v1584 = vpop.f32.mrb[0].mxu0
    %v1585 = vadd.f32 %v873, %v1584
    %1586 = vdwg.mxu0
    %1587 = vmatprep.subr.mxu0 %v577
    %1588 = vmatpush1.xpose.msra.mxu0 %v576
    %1589 = vmatprep.subr.mxu0 %v581
    %1590 = vmatpush1.xpose.msra.mxu0 %v580
    %1591 = vmatprep.subr.mxu0 %v585
    %1592 = vmatpush1.xpose.msra.mxu0 %v584
    %1593 = vmatprep.subr.mxu0 %v589
    %1594 = vmatpush1.xpose.msra.mxu0 %v588
    %1595 = vmatprep.subr.mxu0 %v593
    %1596 = vmatpush1.xpose.msra.mxu0 %v592
    %1597 = vmatprep.subr.mxu0 %v597
    %1598 = vmatpush1.xpose.msra.mxu0 %v596
    %1599 = vmatprep.subr.mxu0 %v601
    %1600 = vmatpush1.xpose.msra.mxu0 %v600
    %1601 = vmatprep.subr.mxu0 %v605
    %1602 = vmatpush1.xpose.msra.mxu0 %v604
    %1603 = vmatprep.subr.mxu0 %v609
    %1604 = vmatpush1.xpose.msra.mxu0 %v608
    %1605 = vmatprep.subr.mxu0 %v613
    %1606 = vmatpush1.xpose.msra.mxu0 %v612
    %1607 = vmatprep.subr.mxu0 %v617
    %1608 = vmatpush1.xpose.msra.mxu0 %v616
    %1609 = vmatprep.subr.mxu0 %v621
    %1610 = vmatpush1.xpose.msra.mxu0 %v620
    %1611 = vmatprep.subr.mxu0 %v625
    %1612 = vmatpush1.xpose.msra.mxu0 %v624
    %1613 = vmatprep.subr.mxu0 %v629
    %1614 = vmatpush1.xpose.msra.mxu0 %v628
    %1615 = vmatprep.subr.mxu0 %v633
    %1616 = vmatpush1.xpose.msra.mxu0 %v632
    %1617 = vmatprep.subr.mxu0 %v637
    %1618 = vmatpush1.xpose.msra.mxu0 %v636
    %1619 = vmatprep.subr.mxu0 %v641
    %1620 = vmatpush1.xpose.msra.mxu0 %v640
    %1621 = vmatprep.subr.mxu0 %v645
    %1622 = vmatpush1.xpose.msra.mxu0 %v644
    %1623 = vmatprep.subr.mxu0 %v649
    %1624 = vmatpush1.xpose.msra.mxu0 %v648
    %1625 = vmatprep.subr.mxu0 %v653
    %1626 = vmatpush1.xpose.msra.mxu0 %v652
    %1627 = vmatprep.subr.mxu0 %v657
    %1628 = vmatpush1.xpose.msra.mxu0 %v656
    %1629 = vmatprep.subr.mxu0 %v661
    %1630 = vmatpush1.xpose.msra.mxu0 %v660
    %1631 = vmatprep.subr.mxu0 %v665
    %1632 = vmatpush1.xpose.msra.mxu0 %v664
    %1633 = vmatprep.subr.mxu0 %v669
    %1634 = vmatpush1.xpose.msra.mxu0 %v668
    %1635 = vmatprep.subr.mxu0 %v673
    %1636 = vmatpush1.xpose.msra.mxu0 %v672
    %1637 = vmatprep.subr.mxu0 %v677
    %1638 = vmatpush1.xpose.msra.mxu0 %v676
    %1639 = vmatprep.subr.mxu0 %v681
    %1640 = vmatpush1.xpose.msra.mxu0 %v680
    %1641 = vmatprep.subr.mxu0 %v685
    %1642 = vmatpush1.xpose.msra.mxu0 %v684
    %1643 = vmatprep.subr.mxu0 %v689
    %1644 = vmatpush1.xpose.msra.mxu0 %v688
    %1645 = vmatprep.subr.mxu0 %v693
    %1646 = vmatpush1.xpose.msra.mxu0 %v692
    %1647 = vmatprep.subr.mxu0 %v697
    %1648 = vmatpush1.xpose.msra.mxu0 %v696
    %1649 = vmatprep.subr.mxu0 %v701
    %1650 = vmatpush1.xpose.msra.mxu0 %v700
    %1651 = vmatprep.mubr.f32.mxu0 %v57
    %1652 = vmatmul.mubr.f32.gmra.mrb[0].mxu0 %v56
    %v1653 = vpop.f32.mrb[0].mxu0
    %v1654 = vadd.f32 %v1577, %v1653
    %v1655 = vpop.f32.mrb[0].mxu0
    %v1656 = vadd.f32 %v1579, %v1655
    %1657 = vmatprep.mubr.f32.mxu0 %v61
    %1658 = vmatmul.mubr.f32.gmra.mrb[0].mxu0 %v60
    %v1659 = vpop.f32.mrb[0].mxu0
    %v1660 = vadd.f32 %v1583, %v1659
    %v1661 = vpop.f32.mrb[0].mxu0
    %v1662 = vadd.f32 %v1585, %v1661
    %1663 = vdwg.mxu0
    %1664 = vmatprep.subr.mxu0 %v703
    %1665 = vmatpush1.xpose.msra.mxu0 %v702
    %1666 = vmatprep.subr.mxu0 %v707
    %1667 = vmatpush1.xpose.msra.mxu0 %v706
    %1668 = vmatprep.subr.mxu0 %v711
    %1669 = vmatpush1.xpose.msra.mxu0 %v710
    %1670 = vmatprep.subr.mxu0 %v715
    %1671 = vmatpush1.xpose.msra.mxu0 %v714
    %1672 = vmatprep.subr.mxu0 %v719
    %1673 = vmatpush1.xpose.msra.mxu0 %v718
    %1674 = vmatprep.subr.mxu0 %v723
    %1675 = vmatpush1.xpose.msra.mxu0 %v722
    %1676 = vmatprep.subr.mxu0 %v727
    %1677 = vmatpush1.xpose.msra.mxu0 %v726
    %1678 = vmatprep.subr.mxu0 %v731
    %1679 = vmatpush1.xpose.msra.mxu0 %v730
    %1680 = vmatprep.subr.mxu0 %v735
    %1681 = vmatpush1.xpose.msra.mxu0 %v734
    %1682 = vmatprep.subr.mxu0 %v739
    %1683 = vmatpush1.xpose.msra.mxu0 %v738
    %1684 = vmatprep.subr.mxu0 %v743
    %1685 = vmatpush1.xpose.msra.mxu0 %v742
    %1686 = vmatprep.subr.mxu0 %v747
    %1687 = vmatpush1.xpose.msra.mxu0 %v746
    %1688 = vmatprep.subr.mxu0 %v751
    %1689 = vmatpush1.xpose.msra.mxu0 %v750
    %1690 = vmatprep.subr.mxu0 %v755
    %1691 = vmatpush1.xpose.msra.mxu0 %v754
    %1692 = vmatprep.subr.mxu0 %v759
    %1693 = vmatpush1.xpose.msra.mxu0 %v758
    %1694 = vmatprep.subr.mxu0 %v763
    %1695 = vmatpush1.xpose.msra.mxu0 %v762
    %1696 = vmatprep.subr.mxu0 %v767
    %1697 = vmatpush1.xpose.msra.mxu0 %v766
    %1698 = vmatprep.subr.mxu0 %v771
    %1699 = vmatpush1.xpose.msra.mxu0 %v770
    %1700 = vmatprep.subr.mxu0 %v775
    %1701 = vmatpush1.xpose.msra.mxu0 %v774
    %1702 = vmatprep.subr.mxu0 %v779
    %1703 = vmatpush1.xpose.msra.mxu0 %v778
    %1704 = vmatprep.subr.mxu0 %v783
    %1705 = vmatpush1.xpose.msra.mxu0 %v782
    %1706 = vmatprep.subr.mxu0 %v787
    %1707 = vmatpush1.xpose.msra.mxu0 %v786
    %1708 = vmatprep.subr.mxu0 %v791
    %1709 = vmatpush1.xpose.msra.mxu0 %v790
    %1710 = vmatprep.subr.mxu0 %v795
    %1711 = vmatpush1.xpose.msra.mxu0 %v794
    %1712 = vmatprep.subr.mxu0 %v799
    %1713 = vmatpush1.xpose.msra.mxu0 %v798
    %1714 = vmatprep.subr.mxu0 %v803
    %1715 = vmatpush1.xpose.msra.mxu0 %v802
    %1716 = vmatprep.subr.mxu0 %v807
    %1717 = vmatpush1.xpose.msra.mxu0 %v806
    %1718 = vmatprep.subr.mxu0 %v811
    %1719 = vmatpush1.xpose.msra.mxu0 %v810
    %1720 = vmatprep.subr.mxu0 %v815
    %1721 = vmatpush1.xpose.msra.mxu0 %v814
    %1722 = vmatprep.subr.mxu0 %v819
    %1723 = vmatpush1.xpose.msra.mxu0 %v818
    %1724 = vmatprep.subr.mxu0 %v823
    %1725 = vmatpush1.xpose.msra.mxu0 %v822
    %1726 = vmatprep.subr.mxu0 %v827
    %1727 = vmatpush1.xpose.msra.mxu0 %v826
    %1728 = vmatprep.mubr.f32.mxu0 %v55
    %1729 = vmatmul.mubr.f32.gmra.mrb[0].mxu0 %v54
    %v1730 = vpop.f32.mrb[0].mxu0
    %v1731 = vadd.f32 %v877, %v1730
    %v1732 = vpop.f32.mrb[0].mxu0
    %v1733 = vadd.f32 %v881, %v1732
    %1734 = vmatprep.mubr.f32.mxu0 %v59
    %1735 = vmatmul.mubr.f32.gmra.mrb[0].mxu0 %v58
    %v1736 = vpop.f32.mrb[0].mxu0
    %v1737 = vadd.f32 %v877, %v1736
    %v1738 = vpop.f32.mrb[0].mxu0
    %v1739 = vadd.f32 %v881, %v1738
    %1740 = vdwg.mxu0
    %1741 = vmatprep.subr.mxu0 %v705
    %1742 = vmatpush1.xpose.msra.mxu0 %v704
    %1743 = vmatprep.subr.mxu0 %v709
    %1744 = vmatpush1.xpose.msra.mxu0 %v708
    %1745 = vmatprep.subr.mxu0 %v713
    %1746 = vmatpush1.xpose.msra.mxu0 %v712
    %1747 = vmatprep.subr.mxu0 %v717
    %1748 = vmatpush1.xpose.msra.mxu0 %v716
    %1749 = vmatprep.subr.mxu0 %v721
    %1750 = vmatpush1.xpose.msra.mxu0 %v720
    %1751 = vmatprep.subr.mxu0 %v725
    %1752 = vmatpush1.xpose.msra.mxu0 %v724
    %1753 = vmatprep.subr.mxu0 %v729
    %1754 = vmatpush1.xpose.msra.mxu0 %v728
    %1755 = vmatprep.subr.mxu0 %v733
    %1756 = vmatpush1.xpose.msra.mxu0 %v732
    %1757 = vmatprep.subr.mxu0 %v737
    %1758 = vmatpush1.xpose.msra.mxu0 %v736
    %1759 = vmatprep.subr.mxu0 %v741
    %1760 = vmatpush1.xpose.msra.mxu0 %v740
    %1761 = vmatprep.subr.mxu0 %v745
    %1762 = vmatpush1.xpose.msra.mxu0 %v744
    %1763 = vmatprep.subr.mxu0 %v749
    %1764 = vmatpush1.xpose.msra.mxu0 %v748
    %1765 = vmatprep.subr.mxu0 %v753
    %1766 = vmatpush1.xpose.msra.mxu0 %v752
    %1767 = vmatprep.subr.mxu0 %v757
    %1768 = vmatpush1.xpose.msra.mxu0 %v756
    %1769 = vmatprep.subr.mxu0 %v761
    %1770 = vmatpush1.xpose.msra.mxu0 %v760
    %1771 = vmatprep.subr.mxu0 %v765
    %1772 = vmatpush1.xpose.msra.mxu0 %v764
    %1773 = vmatprep.subr.mxu0 %v769
    %1774 = vmatpush1.xpose.msra.mxu0 %v768
    %1775 = vmatprep.subr.mxu0 %v773
    %1776 = vmatpush1.xpose.msra.mxu0 %v772
    %1777 = vmatprep.subr.mxu0 %v777
    %1778 = vmatpush1.xpose.msra.mxu0 %v776
    %1779 = vmatprep.subr.mxu0 %v781
    %1780 = vmatpush1.xpose.msra.mxu0 %v780
    %1781 = vmatprep.subr.mxu0 %v785
    %1782 = vmatpush1.xpose.msra.mxu0 %v784
    %1783 = vmatprep.subr.mxu0 %v789
    %1784 = vmatpush1.xpose.msra.mxu0 %v788
    %1785 = vmatprep.subr.mxu0 %v793
    %1786 = vmatpush1.xpose.msra.mxu0 %v792
    %1787 = vmatprep.subr.mxu0 %v797
    %1788 = vmatpush1.xpose.msra.mxu0 %v796
    %1789 = vmatprep.subr.mxu0 %v801
    %1790 = vmatpush1.xpose.msra.mxu0 %v800
    %1791 = vmatprep.subr.mxu0 %v805
    %1792 = vmatpush1.xpose.msra.mxu0 %v804
    %1793 = vmatprep.subr.mxu0 %v809
    %1794 = vmatpush1.xpose.msra.mxu0 %v808
    %1795 = vmatprep.subr.mxu0 %v813
    %1796 = vmatpush1.xpose.msra.mxu0 %v812
    %1797 = vmatprep.subr.mxu0 %v817
    %1798 = vmatpush1.xpose.msra.mxu0 %v816
    %1799 = vmatprep.subr.mxu0 %v821
    %1800 = vmatpush1.xpose.msra.mxu0 %v820
    %1801 = vmatprep.subr.mxu0 %v825
    %1802 = vmatpush1.xpose.msra.mxu0 %v824
    %1803 = vmatprep.subr.mxu0 %v829
    %1804 = vmatpush1.xpose.msra.mxu0 %v828
    %1805 = vmatprep.mubr.f32.mxu0 %v57
    %1806 = vmatmul.mubr.f32.gmra.mrb[0].mxu0 %v56
    %v1807 = vpop.f32.mrb[0].mxu0
    %v1808 = vadd.f32 %v1731, %v1807
    %v1809 = vpop.f32.mrb[0].mxu0
    %v1810 = vadd.f32 %v1733, %v1809
    %1811 = vmatprep.mubr.f32.mxu0 %v61
    %1812 = vmatmul.mubr.f32.gmra.mrb[0].mxu0 %v60
    %v1813 = vpop.f32.mrb[0].mxu0
    %v1814 = vadd.f32 %v1737, %v1813
    %v1815 = vpop.f32.mrb[0].mxu0
    %v1816 = vadd.f32 %v1739, %v1815
    %1817 = vdwg.mxu0
    %1818 = vst [vmem:[#allocation8] sm:$0xff] %v1038
    %1819 = vst [vmem:[#allocation8 + $0x8] sm:$0xff] %v1040
    %1820 = vst [vmem:[#allocation8 + $0x10] sm:$0xff] %v1192
    %1821 = vst [vmem:[#allocation8 + $0x18] sm:$0xff] %v1194
    %1822 = vst [vmem:[#allocation8 + $0x20] sm:$0xff] %v1346
    %1823 = vst [vmem:[#allocation8 + $0x28] sm:$0xff] %v1348
    %1824 = vst [vmem:[#allocation8 + $0x30] sm:$0xff] %v1500
    %1825 = vst [vmem:[#allocation8 + $0x38] sm:$0xff] %v1502
    %1826 = vst [vmem:[#allocation8 + $0x40] sm:$0xff] %v1654
    %1827 = vst [vmem:[#allocation8 + $0x48] sm:$0xff] %v1656
    %1828 = vst [vmem:[#allocation8 + $0x50] sm:$0xff] %v1808
    %1829 = vst [vmem:[#allocation8 + $0x58] sm:$0xff] %v1810
    %1830 = vst [vmem:[#allocation8 + $0x60] sm:$0xff] %v1044
    %1831 = vst [vmem:[#allocation8 + $0x68] sm:$0xff] %v1046
    %1832 = vst [vmem:[#allocation8 + $0x70] sm:$0xff] %v1198
    %1833 = vst [vmem:[#allocation8 + $0x78] sm:$0xff] %v1200
    %1834 = vst [vmem:[#allocation8 + $0x80] sm:$0xff] %v1352
    %1835 = vst [vmem:[#allocation8 + $0x88] sm:$0xff] %v1354
    %1836 = vst [vmem:[#allocation8 + $0x90] sm:$0xff] %v1506
    %1837 = vst [vmem:[#allocation8 + $0x98] sm:$0xff] %v1508
    %1838 = vst [vmem:[#allocation8 + $0xa0] sm:$0xff] %v1660
    %1839 = vst [vmem:[#allocation8 + $0xa8] sm:$0xff] %v1662
    %1840 = vst [vmem:[#allocation8 + $0xb0] sm:$0xff] %v1814
    %1841 = vst [vmem:[#allocation8 + $0xb8] sm:$0xff] %v1816
    // Predicated region
    $region26: #{tpu_custom_call.1} parent=1 // pred_check
      _
    $region27: #{tpu_custom_call.1} parent=1 // pred_check_branch
      %1843 = sbr.rel (0) target = $region29
    $region28: #{tpu_custom_call.1} parent=1 // pred_region
      %s1845 = ssub.s32 3072, 3072
      %1846 = vsyncadd [#allocation4], %s1845
      %s1847 = sshll.u32 [#allocation8], 4
      %s1848 = int_to_ptr.vmem [resolvable:$true] %s1847
      %1853 = dma.vmem_to_hbm [thread:$0]  %s1848, 3072, %s3, [#allocation4], 1536, 1536, 96
    $region29: #{tpu_custom_call.1} parent=1 // pred_fallthru
      _
    // Predicated region
    $region30: #{tpu_custom_call.1} parent=1 // pred_check
      _
    $region31: #{tpu_custom_call.1} parent=1 // pred_check_branch
      %1855 = sbr.rel (0) target = $region33
    $region32: #{tpu_custom_call.1} parent=1 // pred_region
      %1856 = dma.done [#allocation4], 3072
    $region33: #{tpu_custom_call.1} parent=1 // pred_fallthru
      _
    %1857 = vsyncpa [#allocation3], 1
    %1858 = vsyncpa [#allocation6], 1
    %1859 = vsyncpa [#allocation4], 1

</llo_original>
